<compile_context>
chip_gen: v5e
topology: v5e:2x2
jax: 0.10.0
libtpu: 0.0.40
codegen_flags: <defaults>
</compile_context>

<pallas_src>
import math
from typing import NamedTuple, Optional, Tuple

import jax
import jax.numpy as jnp
from jax.experimental import pallas as pl

# ---------------- configuration (small, deterministic shapes) ----------------
B = 2          # batch
S_IN = 8       # input-modality sequence length
S_OUT = 8      # output-modality sequence length
C_IN = 4       # input-modality token feature dim
C_OUT = 6      # output-modality token feature dim
D_MODEL = 32   # transformer hidden size
N_HEAD = 4
HEAD_DIM = D_MODEL // N_HEAD
N_LAYER = 2
D_FF = 4 * D_MODEL
EPS = 1e-5
NEG_INF = -1e30
SCALE = 1.0 / math.sqrt(HEAD_DIM)

# f32 weight-slab row layout (per layer); lane width is always 128 (pre-padded in wrapper).
_ROW_WQKV = 0                 # rows [0, 32)  : fused (D, 3D) q|k|v weight in lanes [0, 96)
_ROW_WO = D_MODEL             # rows [32, 64) : (D, D) attention output projection in lanes [0, 32)
_ROW_PRM = 2 * D_MODEL        # rows [64, 71) : small parameter rows (order below), lanes [0, 32/128)
_PRM_ORDER = ("ln1_w", "ln1_b", "ln2_w", "ln2_b", "bo", "b2", "b1")
_F32_ROWS = _ROW_PRM + 8      # 72 rows total (padded to a multiple of 8)


class TransformerDecoderOutput(NamedTuple):
    last_hidden_states: jnp.ndarray
    hidden_states: Optional[Tuple] = None
    attention_weights: Optional[Tuple] = None
    past_key_values: Optional[Tuple] = None


# ---------------------------------------------------------------------------
# Kernel: token projection + embeddings + all decoder layers, one invocation
# ---------------------------------------------------------------------------
def _make_kernel(n_layer):
    bf16, f32 = jnp.bfloat16, jnp.float32
    D, F = D_MODEL, D_FF

    def layer_norm(v, w, b):           # f32 elementwise path (v5e has no bf16 VPU)
        mu = jnp.mean(v, axis=-1, keepdims=True)
        var = jnp.mean(jnp.square(v - mu), axis=-1, keepdims=True)
        return (v - mu) * jax.lax.rsqrt(var + EPS) * w + b

    def kernel(tok_ref, add_ref, projw_ref, mask_ref, slab_ref, mlp_ref, o_ref):
        # ---- packed modality token projection (one matmul) + pos-emb / token-bias add ----
        x = jnp.dot(tok_ref[...], projw_ref[...],
                    preferred_element_type=f32) + add_ref[...]        # (BS, D)
        mask = mask_ref[...]                                          # (BS, BS) additive bias

        # ---- pre-LN GPT decoder layers (static unroll; weights resident in VMEM) ----
        for l in range(n_layer):
            wqkv = slab_ref[l, _ROW_WQKV:_ROW_WQKV + D, 0:3 * D]      # (D, 3D) f32
            wo = slab_ref[l, _ROW_WO:_ROW_WO + D, 0:D]                # (D, D)  f32
            prms = slab_ref[l, _ROW_PRM:_ROW_PRM + 8, :]              # (8, 128) f32, one load
            ln1_w, ln1_b = prms[0:1, 0:D], prms[1:2, 0:D]
            ln2_w, ln2_b = prms[2:3, 0:D], prms[3:4, 0:D]
            bo, b2 = prms[4:5, 0:D], prms[5:6, 0:D]
            b1 = prms[6:7, 0:F]
            w1 = mlp_ref[l, 0:D, :]                                   # (D, F) bf16
            w2 = mlp_ref[l, D:D + F, 0:D]                             # (F, D) bf16

            # -- attention block (f32 path; fused QKV + fused out-proj) --
            h = layer_norm(x, ln1_w, ln1_b)
            qkv = jnp.dot(h, wqkv, preferred_element_type=f32)        # (BS, 3D), 1 MXU push
            ctx_heads = []
            for hd in range(N_HEAD):
                o0 = hd * HEAD_DIM
                q_h = qkv[:, o0:o0 + HEAD_DIM]
                k_h = qkv[:, D + o0:D + o0 + HEAD_DIM]
                v_h = qkv[:, 2 * D + o0:2 * D + o0 + HEAD_DIM]
                s = jnp.einsum("qd,kd->qk", q_h, k_h,
                               preferred_element_type=f32) * SCALE + mask
                s = s - jnp.max(s, axis=-1, keepdims=True)
                p = jnp.exp(s)
                p = p * pl.reciprocal(jnp.sum(p, axis=-1, keepdims=True), approx=True)
                ctx_heads.append(jnp.dot(p, v_h, preferred_element_type=f32))
            ctx = jnp.concatenate(ctx_heads, axis=-1)                 # (BS, D)
            x = x + jnp.dot(ctx, wo, preferred_element_type=f32) + bo

            # -- MLP block (bf16 MXU operands, f32 accumulation; SiLU in f32) --
            h2 = layer_norm(x, ln2_w, ln2_b)
            m = jnp.dot(h2.astype(bf16), w1, preferred_element_type=f32) + b1   # (BS, F)
            m = m * jax.nn.sigmoid(m)
            m = jnp.dot(m.astype(bf16), w2, preferred_element_type=f32) + b2    # (BS, D)
            x = x + m

        o_ref[...] = x.astype(o_ref.dtype)

    return kernel


# ---------------------------------------------------------------------------
# Wrapper-side packing (layout plumbing, not compute)
# ---------------------------------------------------------------------------
def _pack_layer_slabs(lp):
    """Pack per-layer weights into two lane-128 VMEM slabs (2 DMAs total)."""
    n_layer = lp["wq"].shape[0]

    def lane_pad(a):
        return jnp.pad(a, ((0, 0), (0, 0), (0, 128 - a.shape[-1])))

    wqkv = jnp.concatenate([lp["wq"], lp["wk"], lp["wv"]], axis=-1)      # (L, D, 3D)
    parts = [lane_pad(wqkv), lane_pad(lp["wo"])]
    parts += [lane_pad(lp[name]) for name in _PRM_ORDER]
    pad_rows = _F32_ROWS - (2 * D_MODEL + len(_PRM_ORDER))
    parts.append(jnp.zeros((n_layer, pad_rows, 128), jnp.float32))
    slab_f32 = jnp.concatenate(parts, axis=1)                            # (L, 72, 128) f32

    slab_bf16 = jnp.concatenate([lp["w1"], lane_pad(lp["w2"])],
                                axis=1).astype(jnp.bfloat16)             # (L, D+F, 128) bf16
    return slab_f32, slab_bf16


def _fused_forward(segments, layers, causal):
    """segments: list of (tokens (B,S_i,C_i), add_rows (B,S_i,D), proj_w (C_i,D))."""
    batch = segments[0][0].shape[0]
    s_tot = sum(seg[0].shape[1] for seg in segments)
    bs = batch * s_tot
    n_layer = layers["wq"].shape[0]

    # Pack modality token features side-by-side so the kernel does ONE projection matmul
    # (the in-kernel sequence concat disappears).
    c_tot = sum(seg[0].shape[-1] for seg in segments)
    tok_parts, add_parts, w_parts = [], [], []
    off = 0
    for tok, add, w in segments:
        c = tok.shape[-1]
        tok_parts.append(jnp.pad(tok, ((0, 0), (0, 0), (off, c_tot - off - c))))
        add_parts.append(add)
        w_parts.append(w)
        off += c
    tok_packed = jnp.concatenate(tok_parts, axis=1).reshape(bs, c_tot).astype(jnp.float32)
    add_packed = jnp.concatenate(add_parts, axis=1).reshape(bs, D_MODEL).astype(jnp.float32)
    projw = jnp.concatenate(w_parts, axis=0).astype(jnp.float32)          # (c_tot, D)

    # Block-diagonal (per-batch) additive mask, causal within each batch element.
    idx = jnp.arange(bs, dtype=jnp.int32)
    bi, pi = idx // s_tot, idx % s_tot
    allowed = bi[:, None] == bi[None, :]
    if causal:
        allowed = allowed & (pi[:, None] >= pi[None, :])
    mask = jnp.where(allowed, 0.0, NEG_INF).astype(jnp.float32)

    slab_f32, slab_bf16 = _pack_layer_slabs(layers)

    # Single pallas_call, no grid: batch folded into rows; full arrays land in VMEM
    # (6 input DMAs + 1 output DMA total; everything fits in a few hundred KB of VMEM).
    out = pl.pallas_call(
        _make_kernel(n_layer),
        out_shape=jax.ShapeDtypeStruct((bs, D_MODEL), jnp.float32),
    )(tok_packed, add_packed, projw, mask, slab_f32, slab_bf16)
    return out.reshape(batch, s_tot, D_MODEL)


# ---------------------------------------------------------------------------
# Parameters (deterministic, synthetic) — per-layer weights stacked on axis 0
# ---------------------------------------------------------------------------
def init_params(key):
    def rnd(k, shape, scale=0.02):
        return (scale * jax.random.normal(k, shape)).astype(jnp.float32)

    keys = jax.random.split(key, 13)
    return {
        "in_tok_w":  rnd(keys[0], (C_IN, D_MODEL)),
        "in_tok_b":  rnd(keys[1], (1, D_MODEL)),
        "out_tok_w": rnd(keys[2], (C_OUT, D_MODEL)),
        "out_tok_b": rnd(keys[3], (1, D_MODEL)),
        "in_pos_emb":  rnd(keys[4], (S_IN, D_MODEL)),
        "out_pos_emb": rnd(keys[5], (S_OUT, D_MODEL)),
        "layers": {
            "ln1_w": jnp.ones((N_LAYER, 1, D_MODEL), jnp.float32),
            "ln1_b": jnp.zeros((N_LAYER, 1, D_MODEL), jnp.float32),
            "wq": rnd(keys[6], (N_LAYER, D_MODEL, D_MODEL)),
            "wk": rnd(keys[7], (N_LAYER, D_MODEL, D_MODEL)),
            "wv": rnd(keys[8], (N_LAYER, D_MODEL, D_MODEL)),
            "wo": rnd(keys[9], (N_LAYER, D_MODEL, D_MODEL)),
            "bo": rnd(keys[10], (N_LAYER, 1, D_MODEL)),
            "ln2_w": jnp.ones((N_LAYER, 1, D_MODEL), jnp.float32),
            "ln2_b": jnp.zeros((N_LAYER, 1, D_MODEL), jnp.float32),
            "w1": rnd(keys[11], (N_LAYER, D_MODEL, D_FF)),
            "b1": jnp.zeros((N_LAYER, 1, D_FF), jnp.float32),
            "w2": rnd(keys[12], (N_LAYER, D_FF, D_MODEL)),
            "b2": jnp.zeros((N_LAYER, 1, D_MODEL), jnp.float32),
        },
    }


# ---------------------------------------------------------------------------
# MultimodalTransformerDecoder.forward (Pallas-backed)
# ---------------------------------------------------------------------------
def _pos_rows(table, x, pos_ids):
    b, seq_len, _ = x.shape
    if pos_ids is None:
        # Default position ids -> static slice of the table, no gather kernel.
        return jnp.broadcast_to(table[None, :seq_len], (b, seq_len, table.shape[-1]))
    if pos_ids.shape != (b, seq_len):
        raise ValueError("input sequence and position ids must be equal in batch size and length")
    return jnp.take(table, pos_ids, axis=0)   # glue: embedding gather (uncommon path)


def multimodal_transformer_decoder(params, in_modality=None, out_modality=None,
                                   in_pos_ids=None, out_pos_ids=None,
                                   causal=True) -> TransformerDecoderOutput:
    if in_modality is None and out_modality is None:
        raise ValueError("in_modality and out_modality sequences cannot be both empty")

    segments = []
    if in_modality is not None:
        pos = _pos_rows(params["in_pos_emb"], in_modality, in_pos_ids)
        segments.append((in_modality, pos + params["in_tok_b"][None], params["in_tok_w"]))
    if out_modality is not None:
        pos = _pos_rows(params["out_pos_emb"], out_modality, out_pos_ids)
        segments.append((out_modality, pos + params["out_tok_b"][None], params["out_tok_w"]))

    x = _fused_forward(segments, params["layers"], causal=causal)
    return TransformerDecoderOutput(last_hidden_states=x)


# ---------------------------------------------------------------------------
# Pure-JAX f32 reference (same math) for a correctness check
# ---------------------------------------------------------------------------
def _reference(params, in_modality, out_modality):
    def ln(v, w, b):
        mu = jnp.mean(v, axis=-1, keepdims=True)
        var = jnp.mean(jnp.square(v - mu), axis=-1, keepdims=True)
        return (v - mu) * jax.lax.rsqrt(var + EPS) * w[None] + b[None]

    _, s_in, _ = in_modality.shape
    _, s_out, _ = out_modality.shape
    x_in = (jnp.einsum("bsc,cd->bsd", in_modality, params["in_tok_w"])
            + params["in_tok_b"][None] + params["in_pos_emb"][None, :s_in])
    x_out = (jnp.einsum("bsc,cd->bsd", out_modality, params["out_tok_w"])
             + params["out_tok_b"][None] + params["out_pos_emb"][None, :s_out])
    x = jnp.concatenate([x_in, x_out], axis=1)
    S = x.shape[1]
    causal = jnp.arange(S)[:, None] >= jnp.arange(S)[None, :]
    lp = params["layers"]
    for l in range(N_LAYER):
        h = ln(x, lp["ln1_w"][l], lp["ln1_b"][l])
        q = jnp.einsum("bsd,de->bse", h, lp["wq"][l])
        k = jnp.einsum("bsd,de->bse", h, lp["wk"][l])
        v = jnp.einsum("bsd,de->bse", h, lp["wv"][l])
        outs = []
        for hd in range(N_HEAD):
            sl = slice(hd * HEAD_DIM, (hd + 1) * HEAD_DIM)
            sc = jnp.einsum("bqd,bkd->bqk", q[:, :, sl], k[:, :, sl]) * SCALE
            sc = jnp.where(causal[None], sc, NEG_INF)
            sc = sc - jnp.max(sc, axis=-1, keepdims=True)
            pr = jnp.exp(sc)
            pr = pr / jnp.sum(pr, axis=-1, keepdims=True)
            outs.append(jnp.einsum("bqk,bkd->bqd", pr, v[:, :, sl]))
        attn = jnp.concatenate(outs, axis=-1)
        attn = jnp.einsum("bsd,de->bse", attn, lp["wo"][l]) + lp["bo"][l][None]
        x = x + attn
        h2 = ln(x, lp["ln2_w"][l], lp["ln2_b"][l])
        m = jnp.einsum("bsd,df->bsf", h2, lp["w1"][l]) + lp["b1"][l][None]
        m = m * jax.nn.sigmoid(m)
        m = jnp.einsum("bsf,fd->bsd", m, lp["w2"][l]) + lp["b2"][l][None]
        x = x + m
    return x


# ---------------------------------------------------------------------------
if __name__ == "__main__":
    key = jax.random.PRNGKey(0)
    k_par, k_in, k_out = jax.random.split(key, 3)

    params = init_params(k_par)
    in_modality = jax.random.normal(k_in, (B, S_IN, C_IN), dtype=jnp.float32)
    out_modality = jax.random.normal(k_out, (B, S_OUT, C_OUT), dtype=jnp.float32)

    result = multimodal_transformer_decoder(params, in_modality, out_modality, causal=True)
    y = jax.block_until_ready(result.last_hidden_states)

    assert y.shape == (B, S_IN + S_OUT, D_MODEL), y.shape
    assert bool(jnp.all(jnp.isfinite(y)))

    ref = jax.block_until_ready(_reference(params, in_modality, out_modality))
    assert jnp.allclose(y, ref, atol=2e-2, rtol=2e-2), float(jnp.max(jnp.abs(y - ref)))

    print("KERNEL_OK")
</pallas_src>

<mosaic_0001>
module attributes {stable_mosaic.version = 11 : i64} {
  func.func @kernel(%arg0: memref<32x10xf32, #tpu.memory_space<vmem>>, %arg1: memref<32x32xf32, #tpu.memory_space<vmem>>, %arg2: memref<10x32xf32, #tpu.memory_space<vmem>>, %arg3: memref<32x32xf32, #tpu.memory_space<vmem>>, %arg4: memref<2x72x128xf32, #tpu.memory_space<vmem>>, %arg5: memref<2x160x128xbf16, #tpu.memory_space<vmem>>, %arg6: memref<32x32xf32, #tpu.memory_space<vmem>>) attributes {dimension_semantics = [], scalar_prefetch = 0 : i64, scratch_operands = 0 : i64, tpu.core_type = #tpu.core_type<tc>} {
    %c0 = arith.constant 0 : index
    %c0_0 = arith.constant 0 : index
    %0 = vector.load %arg0[%c0, %c0_0] : memref<32x10xf32, #tpu.memory_space<vmem>>, vector<32x10xf32>
    %c0_1 = arith.constant 0 : index
    %c0_2 = arith.constant 0 : index
    %1 = vector.load %arg2[%c0_1, %c0_2] : memref<10x32xf32, #tpu.memory_space<vmem>>, vector<10x32xf32>
    %cst = arith.constant dense<0.000000e+00> : vector<32x32xf32>
    %2 = tpu.matmul %0, %1, %cst {dimension_numbers = #tpu.dot_dimension_numbers<[1], [0], [0], [1], [0, 0, 1, 1], [], []>} : vector<32x10xf32>, vector<10x32xf32>, vector<32x32xf32> -> vector<32x32xf32>
    %c0_3 = arith.constant 0 : index
    %c0_4 = arith.constant 0 : index
    %3 = vector.load %arg1[%c0_3, %c0_4] : memref<32x32xf32, #tpu.memory_space<vmem>>, vector<32x32xf32>
    %4 = arith.addf %2, %3 : vector<32x32xf32>
    %c0_5 = arith.constant 0 : index
    %c0_6 = arith.constant 0 : index
    %5 = vector.load %arg3[%c0_5, %c0_6] : memref<32x32xf32, #tpu.memory_space<vmem>>, vector<32x32xf32>
    %c0_7 = arith.constant 0 : index
    %c0_8 = arith.constant 0 : index
    %c0_9 = arith.constant 0 : index
    %6 = vector.load %arg4[%c0_7, %c0_8, %c0_9] : memref<2x72x128xf32, #tpu.memory_space<vmem>>, vector<1x32x96xf32>
    %7 = vector.shape_cast %6 : vector<1x32x96xf32> to vector<32x96xf32>
    %c0_10 = arith.constant 0 : index
    %c32 = arith.constant 32 : index
    %c0_11 = arith.constant 0 : index
    %8 = vector.load %arg4[%c0_10, %c32, %c0_11] : memref<2x72x128xf32, #tpu.memory_space<vmem>>, vector<1x32x32xf32>
    %9 = vector.shape_cast %8 : vector<1x32x32xf32> to vector<32x32xf32>
    %c0_12 = arith.constant 0 : index
    %c64 = arith.constant 64 : index
    %c0_13 = arith.constant 0 : index
    %10 = vector.load %arg4[%c0_12, %c64, %c0_13] : memref<2x72x128xf32, #tpu.memory_space<vmem>>, vector<1x8x128xf32>
    %11 = vector.shape_cast %10 : vector<1x8x128xf32> to vector<8x128xf32>
    %12 = vector.extract_strided_slice %11 {offsets = [0, 0], sizes = [1, 32], strides = [1, 1]} : vector<8x128xf32> to vector<1x32xf32>
    %13 = vector.extract_strided_slice %11 {offsets = [1, 0], sizes = [1, 32], strides = [1, 1]} : vector<8x128xf32> to vector<1x32xf32>
    %14 = vector.extract_strided_slice %11 {offsets = [2, 0], sizes = [1, 32], strides = [1, 1]} : vector<8x128xf32> to vector<1x32xf32>
    %15 = vector.extract_strided_slice %11 {offsets = [3, 0], sizes = [1, 32], strides = [1, 1]} : vector<8x128xf32> to vector<1x32xf32>
    %16 = vector.extract_strided_slice %11 {offsets = [4, 0], sizes = [1, 32], strides = [1, 1]} : vector<8x128xf32> to vector<1x32xf32>
    %17 = vector.extract_strided_slice %11 {offsets = [5, 0], sizes = [1, 32], strides = [1, 1]} : vector<8x128xf32> to vector<1x32xf32>
    %18 = vector.extract_strided_slice %11 {offsets = [6, 0], sizes = [1, 128], strides = [1, 1]} : vector<8x128xf32> to vector<1x128xf32>
    %c0_14 = arith.constant 0 : index
    %c0_15 = arith.constant 0 : index
    %c0_16 = arith.constant 0 : index
    %19 = vector.load %arg5[%c0_14, %c0_15, %c0_16] : memref<2x160x128xbf16, #tpu.memory_space<vmem>>, vector<1x32x128xbf16>
    %20 = vector.shape_cast %19 : vector<1x32x128xbf16> to vector<32x128xbf16>
    %c0_17 = arith.constant 0 : index
    %c32_18 = arith.constant 32 : index
    %c0_19 = arith.constant 0 : index
    %21 = vector.load %arg5[%c0_17, %c32_18, %c0_19] : memref<2x160x128xbf16, #tpu.memory_space<vmem>>, vector<1x128x32xbf16>
    %22 = vector.shape_cast %21 : vector<1x128x32xbf16> to vector<128x32xbf16>
    %cst_20 = arith.constant dense<0.000000e+00> : vector<32xf32>
    %23 = vector.multi_reduction <add>, %4, %cst_20 [1] : vector<32x32xf32> to vector<32xf32>
    %24 = vector.shape_cast %23 : vector<32xf32> to vector<32x1xf32>
    %cst_21 = arith.constant 3.200000e+01 : f32
    %25 = vector.broadcast %cst_21 : f32 to vector<32x1xf32>
    %26 = arith.divf %24, %25 : vector<32x1xf32>
    %27 = vector.broadcast %26 : vector<32x1xf32> to vector<32x32xf32>
    %28 = arith.subf %4, %27 : vector<32x32xf32>
    %29 = arith.mulf %28, %28 : vector<32x32xf32>
    %cst_22 = arith.constant dense<0.000000e+00> : vector<32xf32>
    %30 = vector.multi_reduction <add>, %29, %cst_22 [1] : vector<32x32xf32> to vector<32xf32>
    %31 = vector.shape_cast %30 : vector<32xf32> to vector<32x1xf32>
    %cst_23 = arith.constant 3.200000e+01 : f32
    %32 = vector.broadcast %cst_23 : f32 to vector<32x1xf32>
    %33 = arith.divf %31, %32 : vector<32x1xf32>
    %34 = vector.broadcast %26 : vector<32x1xf32> to vector<32x32xf32>
    %35 = arith.subf %4, %34 : vector<32x32xf32>
    %cst_24 = arith.constant 9.99999974E-6 : f32
    %36 = vector.broadcast %cst_24 : f32 to vector<32x1xf32>
    %37 = arith.addf %33, %36 : vector<32x1xf32>
    %38 = math.rsqrt %37 : vector<32x1xf32>
    %39 = vector.broadcast %38 : vector<32x1xf32> to vector<32x32xf32>
    %40 = arith.mulf %35, %39 : vector<32x32xf32>
    %41 = vector.broadcast %12 : vector<1x32xf32> to vector<32x32xf32>
    %42 = arith.mulf %40, %41 : vector<32x32xf32>
    %43 = vector.broadcast %13 : vector<1x32xf32> to vector<32x32xf32>
    %44 = arith.addf %42, %43 : vector<32x32xf32>
    %cst_25 = arith.constant dense<0.000000e+00> : vector<32x96xf32>
    %45 = tpu.matmul %44, %7, %cst_25 {dimension_numbers = #tpu.dot_dimension_numbers<[1], [0], [0], [1], [0, 0, 1, 1], [], []>} : vector<32x32xf32>, vector<32x96xf32>, vector<32x96xf32> -> vector<32x96xf32>
    %46 = vector.extract_strided_slice %45 {offsets = [0, 0], sizes = [32, 8], strides = [1, 1]} : vector<32x96xf32> to vector<32x8xf32>
    %47 = vector.extract_strided_slice %45 {offsets = [0, 32], sizes = [32, 8], strides = [1, 1]} : vector<32x96xf32> to vector<32x8xf32>
    %48 = vector.extract_strided_slice %45 {offsets = [0, 64], sizes = [32, 8], strides = [1, 1]} : vector<32x96xf32> to vector<32x8xf32>
    "tpu.trace_start"() <{level = 10 : i32, message = "qd,kd->qk"}> : () -> ()
    %cst_26 = arith.constant dense<0.000000e+00> : vector<32x32xf32>
    %49 = tpu.matmul %46, %47, %cst_26 {dimension_numbers = #tpu.dot_dimension_numbers<[1], [1], [0], [0], [0, 0, 1, 0], [], []>} : vector<32x8xf32>, vector<32x8xf32>, vector<32x32xf32> -> vector<32x32xf32>
    "tpu.trace_stop"() : () -> ()
    %cst_27 = arith.constant 0.353553385 : f32
    %50 = vector.broadcast %cst_27 : f32 to vector<32x32xf32>
    %51 = arith.mulf %49, %50 : vector<32x32xf32>
    %52 = arith.addf %51, %5 : vector<32x32xf32>
    %cst_28 = arith.constant dense<0xFF800000> : vector<32xf32>
    %53 = vector.multi_reduction <maximumf>, %52, %cst_28 [1] : vector<32x32xf32> to vector<32xf32>
    %54 = vector.shape_cast %53 : vector<32xf32> to vector<32x1xf32>
    %55 = vector.broadcast %54 : vector<32x1xf32> to vector<32x32xf32>
    %56 = arith.subf %52, %55 : vector<32x32xf32>
    %57 = math.exp %56 : vector<32x32xf32>
    %cst_29 = arith.constant dense<0.000000e+00> : vector<32xf32>
    %58 = vector.multi_reduction <add>, %57, %cst_29 [1] : vector<32x32xf32> to vector<32xf32>
    %59 = vector.shape_cast %58 : vector<32xf32> to vector<32x1xf32>
    %60 = tpu.reciprocal %59 {approx = true} : vector<32x1xf32> -> vector<32x1xf32>
    %61 = vector.broadcast %60 : vector<32x1xf32> to vector<32x32xf32>
    %62 = arith.mulf %57, %61 : vector<32x32xf32>
    %cst_30 = arith.constant dense<0.000000e+00> : vector<32x8xf32>
    %63 = tpu.matmul %62, %48, %cst_30 {dimension_numbers = #tpu.dot_dimension_numbers<[1], [0], [0], [1], [0, 0, 1, 1], [], []>} : vector<32x32xf32>, vector<32x8xf32>, vector<32x8xf32> -> vector<32x8xf32>
    %64 = vector.extract_strided_slice %45 {offsets = [0, 8], sizes = [32, 8], strides = [1, 1]} : vector<32x96xf32> to vector<32x8xf32>
    %65 = vector.extract_strided_slice %45 {offsets = [0, 40], sizes = [32, 8], strides = [1, 1]} : vector<32x96xf32> to vector<32x8xf32>
    %66 = vector.extract_strided_slice %45 {offsets = [0, 72], sizes = [32, 8], strides = [1, 1]} : vector<32x96xf32> to vector<32x8xf32>
    "tpu.trace_start"() <{level = 10 : i32, message = "qd,kd->qk"}> : () -> ()
    %cst_31 = arith.constant dense<0.000000e+00> : vector<32x32xf32>
    %67 = tpu.matmul %64, %65, %cst_31 {dimension_numbers = #tpu.dot_dimension_numbers<[1], [1], [0], [0], [0, 0, 1, 0], [], []>} : vector<32x8xf32>, vector<32x8xf32>, vector<32x32xf32> -> vector<32x32xf32>
    "tpu.trace_stop"() : () -> ()
    %cst_32 = arith.constant 0.353553385 : f32
    %68 = vector.broadcast %cst_32 : f32 to vector<32x32xf32>
    %69 = arith.mulf %67, %68 : vector<32x32xf32>
    %70 = arith.addf %69, %5 : vector<32x32xf32>
    %cst_33 = arith.constant dense<0xFF800000> : vector<32xf32>
    %71 = vector.multi_reduction <maximumf>, %70, %cst_33 [1] : vector<32x32xf32> to vector<32xf32>
    %72 = vector.shape_cast %71 : vector<32xf32> to vector<32x1xf32>
    %73 = vector.broadcast %72 : vector<32x1xf32> to vector<32x32xf32>
    %74 = arith.subf %70, %73 : vector<32x32xf32>
    %75 = math.exp %74 : vector<32x32xf32>
    %cst_34 = arith.constant dense<0.000000e+00> : vector<32xf32>
    %76 = vector.multi_reduction <add>, %75, %cst_34 [1] : vector<32x32xf32> to vector<32xf32>
    %77 = vector.shape_cast %76 : vector<32xf32> to vector<32x1xf32>
    %78 = tpu.reciprocal %77 {approx = true} : vector<32x1xf32> -> vector<32x1xf32>
    %79 = vector.broadcast %78 : vector<32x1xf32> to vector<32x32xf32>
    %80 = arith.mulf %75, %79 : vector<32x32xf32>
    %cst_35 = arith.constant dense<0.000000e+00> : vector<32x8xf32>
    %81 = tpu.matmul %80, %66, %cst_35 {dimension_numbers = #tpu.dot_dimension_numbers<[1], [0], [0], [1], [0, 0, 1, 1], [], []>} : vector<32x32xf32>, vector<32x8xf32>, vector<32x8xf32> -> vector<32x8xf32>
    %82 = vector.extract_strided_slice %45 {offsets = [0, 16], sizes = [32, 8], strides = [1, 1]} : vector<32x96xf32> to vector<32x8xf32>
    %83 = vector.extract_strided_slice %45 {offsets = [0, 48], sizes = [32, 8], strides = [1, 1]} : vector<32x96xf32> to vector<32x8xf32>
    %84 = vector.extract_strided_slice %45 {offsets = [0, 80], sizes = [32, 8], strides = [1, 1]} : vector<32x96xf32> to vector<32x8xf32>
    "tpu.trace_start"() <{level = 10 : i32, message = "qd,kd->qk"}> : () -> ()
    %cst_36 = arith.constant dense<0.000000e+00> : vector<32x32xf32>
    %85 = tpu.matmul %82, %83, %cst_36 {dimension_numbers = #tpu.dot_dimension_numbers<[1], [1], [0], [0], [0, 0, 1, 0], [], []>} : vector<32x8xf32>, vector<32x8xf32>, vector<32x32xf32> -> vector<32x32xf32>
    "tpu.trace_stop"() : () -> ()
    %cst_37 = arith.constant 0.353553385 : f32
    %86 = vector.broadcast %cst_37 : f32 to vector<32x32xf32>
    %87 = arith.mulf %85, %86 : vector<32x32xf32>
    %88 = arith.addf %87, %5 : vector<32x32xf32>
    %cst_38 = arith.constant dense<0xFF800000> : vector<32xf32>
    %89 = vector.multi_reduction <maximumf>, %88, %cst_38 [1] : vector<32x32xf32> to vector<32xf32>
    %90 = vector.shape_cast %89 : vector<32xf32> to vector<32x1xf32>
    %91 = vector.broadcast %90 : vector<32x1xf32> to vector<32x32xf32>
    %92 = arith.subf %88, %91 : vector<32x32xf32>
    %93 = math.exp %92 : vector<32x32xf32>
    %cst_39 = arith.constant dense<0.000000e+00> : vector<32xf32>
    %94 = vector.multi_reduction <add>, %93, %cst_39 [1] : vector<32x32xf32> to vector<32xf32>
    %95 = vector.shape_cast %94 : vector<32xf32> to vector<32x1xf32>
    %96 = tpu.reciprocal %95 {approx = true} : vector<32x1xf32> -> vector<32x1xf32>
    %97 = vector.broadcast %96 : vector<32x1xf32> to vector<32x32xf32>
    %98 = arith.mulf %93, %97 : vector<32x32xf32>
    %cst_40 = arith.constant dense<0.000000e+00> : vector<32x8xf32>
    %99 = tpu.matmul %98, %84, %cst_40 {dimension_numbers = #tpu.dot_dimension_numbers<[1], [0], [0], [1], [0, 0, 1, 1], [], []>} : vector<32x32xf32>, vector<32x8xf32>, vector<32x8xf32> -> vector<32x8xf32>
    %100 = vector.extract_strided_slice %45 {offsets = [0, 24], sizes = [32, 8], strides = [1, 1]} : vector<32x96xf32> to vector<32x8xf32>
    %101 = vector.extract_strided_slice %45 {offsets = [0, 56], sizes = [32, 8], strides = [1, 1]} : vector<32x96xf32> to vector<32x8xf32>
    %102 = vector.extract_strided_slice %45 {offsets = [0, 88], sizes = [32, 8], strides = [1, 1]} : vector<32x96xf32> to vector<32x8xf32>
    "tpu.trace_start"() <{level = 10 : i32, message = "qd,kd->qk"}> : () -> ()
    %cst_41 = arith.constant dense<0.000000e+00> : vector<32x32xf32>
    %103 = tpu.matmul %100, %101, %cst_41 {dimension_numbers = #tpu.dot_dimension_numbers<[1], [1], [0], [0], [0, 0, 1, 0], [], []>} : vector<32x8xf32>, vector<32x8xf32>, vector<32x32xf32> -> vector<32x32xf32>
    "tpu.trace_stop"() : () -> ()
    %cst_42 = arith.constant 0.353553385 : f32
    %104 = vector.broadcast %cst_42 : f32 to vector<32x32xf32>
    %105 = arith.mulf %103, %104 : vector<32x32xf32>
    %106 = arith.addf %105, %5 : vector<32x32xf32>
    %cst_43 = arith.constant dense<0xFF800000> : vector<32xf32>
    %107 = vector.multi_reduction <maximumf>, %106, %cst_43 [1] : vector<32x32xf32> to vector<32xf32>
    %108 = vector.shape_cast %107 : vector<32xf32> to vector<32x1xf32>
    %109 = vector.broadcast %108 : vector<32x1xf32> to vector<32x32xf32>
    %110 = arith.subf %106, %109 : vector<32x32xf32>
    %111 = math.exp %110 : vector<32x32xf32>
    %cst_44 = arith.constant dense<0.000000e+00> : vector<32xf32>
    %112 = vector.multi_reduction <add>, %111, %cst_44 [1] : vector<32x32xf32> to vector<32xf32>
    %113 = vector.shape_cast %112 : vector<32xf32> to vector<32x1xf32>
    %114 = tpu.reciprocal %113 {approx = true} : vector<32x1xf32> -> vector<32x1xf32>
    %115 = vector.broadcast %114 : vector<32x1xf32> to vector<32x32xf32>
    %116 = arith.mulf %111, %115 : vector<32x32xf32>
    %cst_45 = arith.constant dense<0.000000e+00> : vector<32x8xf32>
    %117 = tpu.matmul %116, %102, %cst_45 {dimension_numbers = #tpu.dot_dimension_numbers<[1], [0], [0], [1], [0, 0, 1, 1], [], []>} : vector<32x32xf32>, vector<32x8xf32>, vector<32x8xf32> -> vector<32x8xf32>
    %118 = tpu.concatenate %63, %81, %99, %117 in 1 : vector<32x8xf32>, vector<32x8xf32>, vector<32x8xf32>, vector<32x8xf32> -> vector<32x32xf32>
    %cst_46 = arith.constant dense<0.000000e+00> : vector<32x32xf32>
    %119 = tpu.matmul %118, %9, %cst_46 {dimension_numbers = #tpu.dot_dimension_numbers<[1], [0], [0], [1], [0, 0, 1, 1], [], []>} : vector<32x32xf32>, vector<32x32xf32>, vector<32x32xf32> -> vector<32x32xf32>
    %120 = arith.addf %4, %119 : vector<32x32xf32>
    %121 = vector.broadcast %16 : vector<1x32xf32> to vector<32x32xf32>
    %122 = arith.addf %120, %121 : vector<32x32xf32>
    %cst_47 = arith.constant dense<0.000000e+00> : vector<32xf32>
    %123 = vector.multi_reduction <add>, %122, %cst_47 [1] : vector<32x32xf32> to vector<32xf32>
    %124 = vector.shape_cast %123 : vector<32xf32> to vector<32x1xf32>
    %cst_48 = arith.constant 3.200000e+01 : f32
    %125 = vector.broadcast %cst_48 : f32 to vector<32x1xf32>
    %126 = arith.divf %124, %125 : vector<32x1xf32>
    %127 = vector.broadcast %126 : vector<32x1xf32> to vector<32x32xf32>
    %128 = arith.subf %122, %127 : vector<32x32xf32>
    %129 = arith.mulf %128, %128 : vector<32x32xf32>
    %cst_49 = arith.constant dense<0.000000e+00> : vector<32xf32>
    %130 = vector.multi_reduction <add>, %129, %cst_49 [1] : vector<32x32xf32> to vector<32xf32>
    %131 = vector.shape_cast %130 : vector<32xf32> to vector<32x1xf32>
    %cst_50 = arith.constant 3.200000e+01 : f32
    %132 = vector.broadcast %cst_50 : f32 to vector<32x1xf32>
    %133 = arith.divf %131, %132 : vector<32x1xf32>
    %134 = vector.broadcast %126 : vector<32x1xf32> to vector<32x32xf32>
    %135 = arith.subf %122, %134 : vector<32x32xf32>
    %cst_51 = arith.constant 9.99999974E-6 : f32
    %136 = vector.broadcast %cst_51 : f32 to vector<32x1xf32>
    %137 = arith.addf %133, %136 : vector<32x1xf32>
    %138 = math.rsqrt %137 : vector<32x1xf32>
    %139 = vector.broadcast %138 : vector<32x1xf32> to vector<32x32xf32>
    %140 = arith.mulf %135, %139 : vector<32x32xf32>
    %141 = vector.broadcast %14 : vector<1x32xf32> to vector<32x32xf32>
    %142 = arith.mulf %140, %141 : vector<32x32xf32>
    %143 = vector.broadcast %15 : vector<1x32xf32> to vector<32x32xf32>
    %144 = arith.addf %142, %143 : vector<32x32xf32>
    %145 = arith.truncf %144 : vector<32x32xf32> to vector<32x32xbf16>
    %cst_52 = arith.constant dense<0.000000e+00> : vector<32x128xf32>
    %146 = tpu.matmul %145, %20, %cst_52 {dimension_numbers = #tpu.dot_dimension_numbers<[1], [0], [0], [1], [0, 0, 1, 1], [], []>} : vector<32x32xbf16>, vector<32x128xbf16>, vector<32x128xf32> -> vector<32x128xf32>
    %147 = vector.broadcast %18 : vector<1x128xf32> to vector<32x128xf32>
    %148 = arith.addf %146, %147 : vector<32x128xf32>
    %149 = arith.negf %148 : vector<32x128xf32>
    %150 = math.exp %149 : vector<32x128xf32>
    %cst_53 = arith.constant 1.000000e+00 : f32
    %151 = vector.broadcast %cst_53 : f32 to vector<32x128xf32>
    %152 = arith.addf %151, %150 : vector<32x128xf32>
    %153 = arith.divf %151, %152 : vector<32x128xf32>
    %154 = arith.mulf %148, %153 : vector<32x128xf32>
    %155 = arith.truncf %154 : vector<32x128xf32> to vector<32x128xbf16>
    %cst_54 = arith.constant dense<0.000000e+00> : vector<32x32xf32>
    %156 = tpu.matmul %155, %22, %cst_54 {dimension_numbers = #tpu.dot_dimension_numbers<[1], [0], [0], [1], [0, 0, 1, 1], [], []>} : vector<32x128xbf16>, vector<128x32xbf16>, vector<32x32xf32> -> vector<32x32xf32>
    %157 = vector.broadcast %17 : vector<1x32xf32> to vector<32x32xf32>
    %158 = arith.addf %156, %157 : vector<32x32xf32>
    %159 = arith.addf %122, %158 : vector<32x32xf32>
    %c1 = arith.constant 1 : index
    %c0_55 = arith.constant 0 : index
    %c0_56 = arith.constant 0 : index
    %160 = vector.load %arg4[%c1, %c0_55, %c0_56] : memref<2x72x128xf32, #tpu.memory_space<vmem>>, vector<1x32x96xf32>
    %161 = vector.shape_cast %160 : vector<1x32x96xf32> to vector<32x96xf32>
    %c1_57 = arith.constant 1 : index
    %c32_58 = arith.constant 32 : index
    %c0_59 = arith.constant 0 : index
    %162 = vector.load %arg4[%c1_57, %c32_58, %c0_59] : memref<2x72x128xf32, #tpu.memory_space<vmem>>, vector<1x32x32xf32>
    %163 = vector.shape_cast %162 : vector<1x32x32xf32> to vector<32x32xf32>
    %c1_60 = arith.constant 1 : index
    %c64_61 = arith.constant 64 : index
    %c0_62 = arith.constant 0 : index
    %164 = vector.load %arg4[%c1_60, %c64_61, %c0_62] : memref<2x72x128xf32, #tpu.memory_space<vmem>>, vector<1x8x128xf32>
    %165 = vector.shape_cast %164 : vector<1x8x128xf32> to vector<8x128xf32>
    %166 = vector.extract_strided_slice %165 {offsets = [0, 0], sizes = [1, 32], strides = [1, 1]} : vector<8x128xf32> to vector<1x32xf32>
    %167 = vector.extract_strided_slice %165 {offsets = [1, 0], sizes = [1, 32], strides = [1, 1]} : vector<8x128xf32> to vector<1x32xf32>
    %168 = vector.extract_strided_slice %165 {offsets = [2, 0], sizes = [1, 32], strides = [1, 1]} : vector<8x128xf32> to vector<1x32xf32>
    %169 = vector.extract_strided_slice %165 {offsets = [3, 0], sizes = [1, 32], strides = [1, 1]} : vector<8x128xf32> to vector<1x32xf32>
    %170 = vector.extract_strided_slice %165 {offsets = [4, 0], sizes = [1, 32], strides = [1, 1]} : vector<8x128xf32> to vector<1x32xf32>
    %171 = vector.extract_strided_slice %165 {offsets = [5, 0], sizes = [1, 32], strides = [1, 1]} : vector<8x128xf32> to vector<1x32xf32>
    %172 = vector.extract_strided_slice %165 {offsets = [6, 0], sizes = [1, 128], strides = [1, 1]} : vector<8x128xf32> to vector<1x128xf32>
    %c1_63 = arith.constant 1 : index
    %c0_64 = arith.constant 0 : index
    %c0_65 = arith.constant 0 : index
    %173 = vector.load %arg5[%c1_63, %c0_64, %c0_65] : memref<2x160x128xbf16, #tpu.memory_space<vmem>>, vector<1x32x128xbf16>
    %174 = vector.shape_cast %173 : vector<1x32x128xbf16> to vector<32x128xbf16>
    %c1_66 = arith.constant 1 : index
    %c32_67 = arith.constant 32 : index
    %c0_68 = arith.constant 0 : index
    %175 = vector.load %arg5[%c1_66, %c32_67, %c0_68] : memref<2x160x128xbf16, #tpu.memory_space<vmem>>, vector<1x128x32xbf16>
    %176 = vector.shape_cast %175 : vector<1x128x32xbf16> to vector<128x32xbf16>
    %cst_69 = arith.constant dense<0.000000e+00> : vector<32xf32>
    %177 = vector.multi_reduction <add>, %159, %cst_69 [1] : vector<32x32xf32> to vector<32xf32>
    %178 = vector.shape_cast %177 : vector<32xf32> to vector<32x1xf32>
    %cst_70 = arith.constant 3.200000e+01 : f32
    %179 = vector.broadcast %cst_70 : f32 to vector<32x1xf32>
    %180 = arith.divf %178, %179 : vector<32x1xf32>
    %181 = vector.broadcast %180 : vector<32x1xf32> to vector<32x32xf32>
    %182 = arith.subf %159, %181 : vector<32x32xf32>
    %183 = arith.mulf %182, %182 : vector<32x32xf32>
    %cst_71 = arith.constant dense<0.000000e+00> : vector<32xf32>
    %184 = vector.multi_reduction <add>, %183, %cst_71 [1] : vector<32x32xf32> to vector<32xf32>
    %185 = vector.shape_cast %184 : vector<32xf32> to vector<32x1xf32>
    %cst_72 = arith.constant 3.200000e+01 : f32
    %186 = vector.broadcast %cst_72 : f32 to vector<32x1xf32>
    %187 = arith.divf %185, %186 : vector<32x1xf32>
    %188 = vector.broadcast %180 : vector<32x1xf32> to vector<32x32xf32>
    %189 = arith.subf %159, %188 : vector<32x32xf32>
    %cst_73 = arith.constant 9.99999974E-6 : f32
    %190 = vector.broadcast %cst_73 : f32 to vector<32x1xf32>
    %191 = arith.addf %187, %190 : vector<32x1xf32>
    %192 = math.rsqrt %191 : vector<32x1xf32>
    %193 = vector.broadcast %192 : vector<32x1xf32> to vector<32x32xf32>
    %194 = arith.mulf %189, %193 : vector<32x32xf32>
    %195 = vector.broadcast %166 : vector<1x32xf32> to vector<32x32xf32>
    %196 = arith.mulf %194, %195 : vector<32x32xf32>
    %197 = vector.broadcast %167 : vector<1x32xf32> to vector<32x32xf32>
    %198 = arith.addf %196, %197 : vector<32x32xf32>
    %cst_74 = arith.constant dense<0.000000e+00> : vector<32x96xf32>
    %199 = tpu.matmul %198, %161, %cst_74 {dimension_numbers = #tpu.dot_dimension_numbers<[1], [0], [0], [1], [0, 0, 1, 1], [], []>} : vector<32x32xf32>, vector<32x96xf32>, vector<32x96xf32> -> vector<32x96xf32>
    %200 = vector.extract_strided_slice %199 {offsets = [0, 0], sizes = [32, 8], strides = [1, 1]} : vector<32x96xf32> to vector<32x8xf32>
    %201 = vector.extract_strided_slice %199 {offsets = [0, 32], sizes = [32, 8], strides = [1, 1]} : vector<32x96xf32> to vector<32x8xf32>
    %202 = vector.extract_strided_slice %199 {offsets = [0, 64], sizes = [32, 8], strides = [1, 1]} : vector<32x96xf32> to vector<32x8xf32>
    "tpu.trace_start"() <{level = 10 : i32, message = "qd,kd->qk"}> : () -> ()
    %cst_75 = arith.constant dense<0.000000e+00> : vector<32x32xf32>
    %203 = tpu.matmul %200, %201, %cst_75 {dimension_numbers = #tpu.dot_dimension_numbers<[1], [1], [0], [0], [0, 0, 1, 0], [], []>} : vector<32x8xf32>, vector<32x8xf32>, vector<32x32xf32> -> vector<32x32xf32>
    "tpu.trace_stop"() : () -> ()
    %cst_76 = arith.constant 0.353553385 : f32
    %204 = vector.broadcast %cst_76 : f32 to vector<32x32xf32>
    %205 = arith.mulf %203, %204 : vector<32x32xf32>
    %206 = arith.addf %205, %5 : vector<32x32xf32>
    %cst_77 = arith.constant dense<0xFF800000> : vector<32xf32>
    %207 = vector.multi_reduction <maximumf>, %206, %cst_77 [1] : vector<32x32xf32> to vector<32xf32>
    %208 = vector.shape_cast %207 : vector<32xf32> to vector<32x1xf32>
    %209 = vector.broadcast %208 : vector<32x1xf32> to vector<32x32xf32>
    %210 = arith.subf %206, %209 : vector<32x32xf32>
    %211 = math.exp %210 : vector<32x32xf32>
    %cst_78 = arith.constant dense<0.000000e+00> : vector<32xf32>
    %212 = vector.multi_reduction <add>, %211, %cst_78 [1] : vector<32x32xf32> to vector<32xf32>
    %213 = vector.shape_cast %212 : vector<32xf32> to vector<32x1xf32>
    %214 = tpu.reciprocal %213 {approx = true} : vector<32x1xf32> -> vector<32x1xf32>
    %215 = vector.broadcast %214 : vector<32x1xf32> to vector<32x32xf32>
    %216 = arith.mulf %211, %215 : vector<32x32xf32>
    %cst_79 = arith.constant dense<0.000000e+00> : vector<32x8xf32>
    %217 = tpu.matmul %216, %202, %cst_79 {dimension_numbers = #tpu.dot_dimension_numbers<[1], [0], [0], [1], [0, 0, 1, 1], [], []>} : vector<32x32xf32>, vector<32x8xf32>, vector<32x8xf32> -> vector<32x8xf32>
    %218 = vector.extract_strided_slice %199 {offsets = [0, 8], sizes = [32, 8], strides = [1, 1]} : vector<32x96xf32> to vector<32x8xf32>
    %219 = vector.extract_strided_slice %199 {offsets = [0, 40], sizes = [32, 8], strides = [1, 1]} : vector<32x96xf32> to vector<32x8xf32>
    %220 = vector.extract_strided_slice %199 {offsets = [0, 72], sizes = [32, 8], strides = [1, 1]} : vector<32x96xf32> to vector<32x8xf32>
    "tpu.trace_start"() <{level = 10 : i32, message = "qd,kd->qk"}> : () -> ()
    %cst_80 = arith.constant dense<0.000000e+00> : vector<32x32xf32>
    %221 = tpu.matmul %218, %219, %cst_80 {dimension_numbers = #tpu.dot_dimension_numbers<[1], [1], [0], [0], [0, 0, 1, 0], [], []>} : vector<32x8xf32>, vector<32x8xf32>, vector<32x32xf32> -> vector<32x32xf32>
    "tpu.trace_stop"() : () -> ()
    %cst_81 = arith.constant 0.353553385 : f32
    %222 = vector.broadcast %cst_81 : f32 to vector<32x32xf32>
    %223 = arith.mulf %221, %222 : vector<32x32xf32>
    %224 = arith.addf %223, %5 : vector<32x32xf32>
    %cst_82 = arith.constant dense<0xFF800000> : vector<32xf32>
    %225 = vector.multi_reduction <maximumf>, %224, %cst_82 [1] : vector<32x32xf32> to vector<32xf32>
    %226 = vector.shape_cast %225 : vector<32xf32> to vector<32x1xf32>
    %227 = vector.broadcast %226 : vector<32x1xf32> to vector<32x32xf32>
    %228 = arith.subf %224, %227 : vector<32x32xf32>
    %229 = math.exp %228 : vector<32x32xf32>
    %cst_83 = arith.constant dense<0.000000e+00> : vector<32xf32>
    %230 = vector.multi_reduction <add>, %229, %cst_83 [1] : vector<32x32xf32> to vector<32xf32>
    %231 = vector.shape_cast %230 : vector<32xf32> to vector<32x1xf32>
    %232 = tpu.reciprocal %231 {approx = true} : vector<32x1xf32> -> vector<32x1xf32>
    %233 = vector.broadcast %232 : vector<32x1xf32> to vector<32x32xf32>
    %234 = arith.mulf %229, %233 : vector<32x32xf32>
    %cst_84 = arith.constant dense<0.000000e+00> : vector<32x8xf32>
    %235 = tpu.matmul %234, %220, %cst_84 {dimension_numbers = #tpu.dot_dimension_numbers<[1], [0], [0], [1], [0, 0, 1, 1], [], []>} : vector<32x32xf32>, vector<32x8xf32>, vector<32x8xf32> -> vector<32x8xf32>
    %236 = vector.extract_strided_slice %199 {offsets = [0, 16], sizes = [32, 8], strides = [1, 1]} : vector<32x96xf32> to vector<32x8xf32>
    %237 = vector.extract_strided_slice %199 {offsets = [0, 48], sizes = [32, 8], strides = [1, 1]} : vector<32x96xf32> to vector<32x8xf32>
    %238 = vector.extract_strided_slice %199 {offsets = [0, 80], sizes = [32, 8], strides = [1, 1]} : vector<32x96xf32> to vector<32x8xf32>
    "tpu.trace_start"() <{level = 10 : i32, message = "qd,kd->qk"}> : () -> ()
    %cst_85 = arith.constant dense<0.000000e+00> : vector<32x32xf32>
    %239 = tpu.matmul %236, %237, %cst_85 {dimension_numbers = #tpu.dot_dimension_numbers<[1], [1], [0], [0], [0, 0, 1, 0], [], []>} : vector<32x8xf32>, vector<32x8xf32>, vector<32x32xf32> -> vector<32x32xf32>
    "tpu.trace_stop"() : () -> ()
    %cst_86 = arith.constant 0.353553385 : f32
    %240 = vector.broadcast %cst_86 : f32 to vector<32x32xf32>
    %241 = arith.mulf %239, %240 : vector<32x32xf32>
    %242 = arith.addf %241, %5 : vector<32x32xf32>
    %cst_87 = arith.constant dense<0xFF800000> : vector<32xf32>
    %243 = vector.multi_reduction <maximumf>, %242, %cst_87 [1] : vector<32x32xf32> to vector<32xf32>
    %244 = vector.shape_cast %243 : vector<32xf32> to vector<32x1xf32>
    %245 = vector.broadcast %244 : vector<32x1xf32> to vector<32x32xf32>
    %246 = arith.subf %242, %245 : vector<32x32xf32>
    %247 = math.exp %246 : vector<32x32xf32>
    %cst_88 = arith.constant dense<0.000000e+00> : vector<32xf32>
    %248 = vector.multi_reduction <add>, %247, %cst_88 [1] : vector<32x32xf32> to vector<32xf32>
    %249 = vector.shape_cast %248 : vector<32xf32> to vector<32x1xf32>
    %250 = tpu.reciprocal %249 {approx = true} : vector<32x1xf32> -> vector<32x1xf32>
    %251 = vector.broadcast %250 : vector<32x1xf32> to vector<32x32xf32>
    %252 = arith.mulf %247, %251 : vector<32x32xf32>
    %cst_89 = arith.constant dense<0.000000e+00> : vector<32x8xf32>
    %253 = tpu.matmul %252, %238, %cst_89 {dimension_numbers = #tpu.dot_dimension_numbers<[1], [0], [0], [1], [0, 0, 1, 1], [], []>} : vector<32x32xf32>, vector<32x8xf32>, vector<32x8xf32> -> vector<32x8xf32>
    %254 = vector.extract_strided_slice %199 {offsets = [0, 24], sizes = [32, 8], strides = [1, 1]} : vector<32x96xf32> to vector<32x8xf32>
    %255 = vector.extract_strided_slice %199 {offsets = [0, 56], sizes = [32, 8], strides = [1, 1]} : vector<32x96xf32> to vector<32x8xf32>
    %256 = vector.extract_strided_slice %199 {offsets = [0, 88], sizes = [32, 8], strides = [1, 1]} : vector<32x96xf32> to vector<32x8xf32>
    "tpu.trace_start"() <{level = 10 : i32, message = "qd,kd->qk"}> : () -> ()
    %cst_90 = arith.constant dense<0.000000e+00> : vector<32x32xf32>
    %257 = tpu.matmul %254, %255, %cst_90 {dimension_numbers = #tpu.dot_dimension_numbers<[1], [1], [0], [0], [0, 0, 1, 0], [], []>} : vector<32x8xf32>, vector<32x8xf32>, vector<32x32xf32> -> vector<32x32xf32>
    "tpu.trace_stop"() : () -> ()
    %cst_91 = arith.constant 0.353553385 : f32
    %258 = vector.broadcast %cst_91 : f32 to vector<32x32xf32>
    %259 = arith.mulf %257, %258 : vector<32x32xf32>
    %260 = arith.addf %259, %5 : vector<32x32xf32>
    %cst_92 = arith.constant dense<0xFF800000> : vector<32xf32>
    %261 = vector.multi_reduction <maximumf>, %260, %cst_92 [1] : vector<32x32xf32> to vector<32xf32>
    %262 = vector.shape_cast %261 : vector<32xf32> to vector<32x1xf32>
    %263 = vector.broadcast %262 : vector<32x1xf32> to vector<32x32xf32>
    %264 = arith.subf %260, %263 : vector<32x32xf32>
    %265 = math.exp %264 : vector<32x32xf32>
    %cst_93 = arith.constant dense<0.000000e+00> : vector<32xf32>
    %266 = vector.multi_reduction <add>, %265, %cst_93 [1] : vector<32x32xf32> to vector<32xf32>
    %267 = vector.shape_cast %266 : vector<32xf32> to vector<32x1xf32>
    %268 = tpu.reciprocal %267 {approx = true} : vector<32x1xf32> -> vector<32x1xf32>
    %269 = vector.broadcast %268 : vector<32x1xf32> to vector<32x32xf32>
    %270 = arith.mulf %265, %269 : vector<32x32xf32>
    %cst_94 = arith.constant dense<0.000000e+00> : vector<32x8xf32>
    %271 = tpu.matmul %270, %256, %cst_94 {dimension_numbers = #tpu.dot_dimension_numbers<[1], [0], [0], [1], [0, 0, 1, 1], [], []>} : vector<32x32xf32>, vector<32x8xf32>, vector<32x8xf32> -> vector<32x8xf32>
    %272 = tpu.concatenate %217, %235, %253, %271 in 1 : vector<32x8xf32>, vector<32x8xf32>, vector<32x8xf32>, vector<32x8xf32> -> vector<32x32xf32>
    %cst_95 = arith.constant dense<0.000000e+00> : vector<32x32xf32>
    %273 = tpu.matmul %272, %163, %cst_95 {dimension_numbers = #tpu.dot_dimension_numbers<[1], [0], [0], [1], [0, 0, 1, 1], [], []>} : vector<32x32xf32>, vector<32x32xf32>, vector<32x32xf32> -> vector<32x32xf32>
    %274 = arith.addf %159, %273 : vector<32x32xf32>
    %275 = vector.broadcast %170 : vector<1x32xf32> to vector<32x32xf32>
    %276 = arith.addf %274, %275 : vector<32x32xf32>
    %cst_96 = arith.constant dense<0.000000e+00> : vector<32xf32>
    %277 = vector.multi_reduction <add>, %276, %cst_96 [1] : vector<32x32xf32> to vector<32xf32>
    %278 = vector.shape_cast %277 : vector<32xf32> to vector<32x1xf32>
    %cst_97 = arith.constant 3.200000e+01 : f32
    %279 = vector.broadcast %cst_97 : f32 to vector<32x1xf32>
    %280 = arith.divf %278, %279 : vector<32x1xf32>
    %281 = vector.broadcast %280 : vector<32x1xf32> to vector<32x32xf32>
    %282 = arith.subf %276, %281 : vector<32x32xf32>
    %283 = arith.mulf %282, %282 : vector<32x32xf32>
    %cst_98 = arith.constant dense<0.000000e+00> : vector<32xf32>
    %284 = vector.multi_reduction <add>, %283, %cst_98 [1] : vector<32x32xf32> to vector<32xf32>
    %285 = vector.shape_cast %284 : vector<32xf32> to vector<32x1xf32>
    %cst_99 = arith.constant 3.200000e+01 : f32
    %286 = vector.broadcast %cst_99 : f32 to vector<32x1xf32>
    %287 = arith.divf %285, %286 : vector<32x1xf32>
    %288 = vector.broadcast %280 : vector<32x1xf32> to vector<32x32xf32>
    %289 = arith.subf %276, %288 : vector<32x32xf32>
    %cst_100 = arith.constant 9.99999974E-6 : f32
    %290 = vector.broadcast %cst_100 : f32 to vector<32x1xf32>
    %291 = arith.addf %287, %290 : vector<32x1xf32>
    %292 = math.rsqrt %291 : vector<32x1xf32>
    %293 = vector.broadcast %292 : vector<32x1xf32> to vector<32x32xf32>
    %294 = arith.mulf %289, %293 : vector<32x32xf32>
    %295 = vector.broadcast %168 : vector<1x32xf32> to vector<32x32xf32>
    %296 = arith.mulf %294, %295 : vector<32x32xf32>
    %297 = vector.broadcast %169 : vector<1x32xf32> to vector<32x32xf32>
    %298 = arith.addf %296, %297 : vector<32x32xf32>
    %299 = arith.truncf %298 : vector<32x32xf32> to vector<32x32xbf16>
    %cst_101 = arith.constant dense<0.000000e+00> : vector<32x128xf32>
    %300 = tpu.matmul %299, %174, %cst_101 {dimension_numbers = #tpu.dot_dimension_numbers<[1], [0], [0], [1], [0, 0, 1, 1], [], []>} : vector<32x32xbf16>, vector<32x128xbf16>, vector<32x128xf32> -> vector<32x128xf32>
    %301 = vector.broadcast %172 : vector<1x128xf32> to vector<32x128xf32>
    %302 = arith.addf %300, %301 : vector<32x128xf32>
    %303 = arith.negf %302 : vector<32x128xf32>
    %304 = math.exp %303 : vector<32x128xf32>
    %cst_102 = arith.constant 1.000000e+00 : f32
    %305 = vector.broadcast %cst_102 : f32 to vector<32x128xf32>
    %306 = arith.addf %305, %304 : vector<32x128xf32>
    %307 = arith.divf %305, %306 : vector<32x128xf32>
    %308 = arith.mulf %302, %307 : vector<32x128xf32>
    %309 = arith.truncf %308 : vector<32x128xf32> to vector<32x128xbf16>
    %cst_103 = arith.constant dense<0.000000e+00> : vector<32x32xf32>
    %310 = tpu.matmul %309, %176, %cst_103 {dimension_numbers = #tpu.dot_dimension_numbers<[1], [0], [0], [1], [0, 0, 1, 1], [], []>} : vector<32x128xbf16>, vector<128x32xbf16>, vector<32x32xf32> -> vector<32x32xf32>
    %311 = vector.broadcast %171 : vector<1x32xf32> to vector<32x32xf32>
    %312 = arith.addf %310, %311 : vector<32x32xf32>
    %313 = arith.addf %276, %312 : vector<32x32xf32>
    %c0_104 = arith.constant 0 : index
    %c0_105 = arith.constant 0 : index
    %314 = vector.load %arg6[%c0_104, %c0_105] : memref<32x32xf32, #tpu.memory_space<vmem>>, vector<32x32xf32>
    tpu.vector_store %arg6[%c0_104, %c0_105], %313 {strides = array<i32>} : memref<32x32xf32, #tpu.memory_space<vmem>>, vector<32x32xf32>,
    return
  }
}

</mosaic_0001>

<llo_original>
// kernel: tpu_custom_call.1
$region0: #{tpu_custom_call.1}
  #allocation0 [shape = 'u32[]', space=smem, size = 0x4, offset = 0x4, fixed_abs, tag = 'smem constant byte address 0x4 - core index']
  #allocation1 [shape = 'u32[72,128]{1,0:T(1,128)}', space=vmem, size = 0x9000, scoped, tag = 'internal scratch']
  %s0 = inlined_call_operand.vmem [shape: f32[32,10], index: 0, kind: input, shape index: {}]
  %s1 = inlined_call_operand.vmem [shape: f32[32,32], index: 1, kind: input, shape index: {}]
  %s2 = inlined_call_operand.vmem [shape: f32[10,32], index: 2, kind: input, shape index: {}]
  %s3 = inlined_call_operand.hbm [shape: f32[32,32], index: 3, kind: input, shape index: {}]
  %s4 = inlined_call_operand.hbm [shape: f32[2,72,128], index: 4, kind: input, shape index: {}]
  %s5 = inlined_call_operand.hbm [shape: bf16[2,160,128], index: 5, kind: input, shape index: {}]
  %s6 = inlined_call_operand.hbm [shape: f32[32,32], index: 6, kind: output, shape index: {}]
  %s7 = sld [smem:[#allocation0]]
  $region46: #{tpu_custom_call.1} parent=0
    _
  %s9 = ssub.s32 1, %s7
  %s10 = scalar_select 0, %s9, %s7
  $region1: #{tpu_custom_call.1} parent=0
    #allocation2 [shape = 'u8[16384]{0}', space=vmem, size = 0x4000, scoped, tag = 'input window, operand 3, single buffered']
    #allocation3 [shape = 's32[1]{0}', space=sflag, size = 0x4, scoped, tag = 'scoped memory for tpu_custom_call.1']
    #allocation4 [shape = 's32[1]{0}', space=sflag, size = 0x4, scoped, tag = 'scoped memory for tpu_custom_call.1']
    #allocation5 [shape = 'u8[73728]{0}', space=vmem, size = 0x12000, scoped, tag = 'input window, operand 4, single buffered']
    #allocation6 [shape = 's32[1]{0}', space=sflag, size = 0x4, scoped, tag = 'scoped memory for tpu_custom_call.1']
    #allocation7 [shape = 'u8[81920]{0}', space=vmem, size = 0x14000, scoped, tag = 'input window, operand 5, single buffered']
    #allocation8 [shape = 'u8[16384]{0}', space=vmem, size = 0x4000, scoped, tag = 'output window, operand 0, single buffered']
    %11 = vsyncpa [#allocation3], 0
    %12 = vsyncpa [#allocation6], 0
    %13 = vsyncpa [#allocation4], 0
    // Predicated region
    $region2: #{tpu_custom_call.1} parent=1 // pred_check
      _
    $region3: #{tpu_custom_call.1} parent=1 // pred_check_branch
      %15 = sbr.rel (0) target = $region5
    $region4: #{tpu_custom_call.1} parent=1 // pred_region
      _
    $region5: #{tpu_custom_call.1} parent=1 // pred_fallthru
      _
    // Predicated region
    $region6: #{tpu_custom_call.1} parent=1 // pred_check
      _
    $region7: #{tpu_custom_call.1} parent=1 // pred_check_branch
      %17 = sbr.rel (0) target = $region9
    $region8: #{tpu_custom_call.1} parent=1 // pred_region
      _
    $region9: #{tpu_custom_call.1} parent=1 // pred_fallthru
      _
    // Predicated region
    $region10: #{tpu_custom_call.1} parent=1 // pred_check
      _
    $region11: #{tpu_custom_call.1} parent=1 // pred_check_branch
      %19 = sbr.rel (0) target = $region13
    $region12: #{tpu_custom_call.1} parent=1 // pred_region
      _
    $region13: #{tpu_custom_call.1} parent=1 // pred_fallthru
      _
    // Predicated region
    $region14: #{tpu_custom_call.1} parent=1 // pred_check
      _
    $region15: #{tpu_custom_call.1} parent=1 // pred_check_branch
      %21 = sbr.rel (0) target = $region17
    $region16: #{tpu_custom_call.1} parent=1 // pred_region
      %23 = vsyncadd [#allocation3], 0
      %s24 = sshll.u32 %s3, 4
      %s25 = int_to_ptr.hbm [resolvable:$true] %s24
      %s26 = sshll.u32 [#allocation2], 4
      %s27 = int_to_ptr.vmem [resolvable:$true] %s26
      %32 = dma.hbm_to_vmem [thread:$0]  %s25, 512, %s27, [#allocation3], 128, 128, 8
    $region17: #{tpu_custom_call.1} parent=1 // pred_fallthru
      _
    // Predicated region
    $region18: #{tpu_custom_call.1} parent=1 // pred_check
      _
    $region19: #{tpu_custom_call.1} parent=1 // pred_check_branch
      %34 = sbr.rel (0) target = $region21
    $region20: #{tpu_custom_call.1} parent=1 // pred_region
      %36 = vsyncadd [#allocation6], 0
      %s37 = sshll.u32 %s4, 4
      %s38 = int_to_ptr.hbm [resolvable:$true] %s37
      %s39 = sshll.u32 [#allocation5], 4
      %s40 = int_to_ptr.vmem [resolvable:$true] %s39
      %45 = dma.hbm_to_vmem [thread:$0]  %s38, 2304, %s40, [#allocation6], 128, 128, 8
    $region21: #{tpu_custom_call.1} parent=1 // pred_fallthru
      _
    // Predicated region
    $region22: #{tpu_custom_call.1} parent=1 // pred_check
      _
    $region23: #{tpu_custom_call.1} parent=1 // pred_check_branch
      %47 = sbr.rel (0) target = $region25
    $region24: #{tpu_custom_call.1} parent=1 // pred_region
      %49 = vsyncadd [#allocation6], 0
      %s50 = sshll.u32 %s5, 4
      %s51 = int_to_ptr.hbm [resolvable:$true] %s50
      %s52 = sshll.u32 [#allocation7], 4
      %s53 = int_to_ptr.vmem [resolvable:$true] %s52
      %58 = dma.hbm_to_vmem [thread:$0]  %s51, 2560, %s53, [#allocation6], 64, 64, 4
    $region25: #{tpu_custom_call.1} parent=1 // pred_fallthru
      _
    // Predicated region
    $region26: #{tpu_custom_call.1} parent=1 // pred_check
      _
    $region27: #{tpu_custom_call.1} parent=1 // pred_check_branch
      %60 = sbr.rel (0) target = $region29
    $region28: #{tpu_custom_call.1} parent=1 // pred_region
      %62 = dma.done [#allocation3], 512
    $region29: #{tpu_custom_call.1} parent=1 // pred_fallthru
      _
    // Predicated region
    $region30: #{tpu_custom_call.1} parent=1 // pred_check
      _
    $region31: #{tpu_custom_call.1} parent=1 // pred_check_branch
      %64 = sbr.rel (0) target = $region33
    $region32: #{tpu_custom_call.1} parent=1 // pred_region
      %66 = dma.done [#allocation6], 2304
    $region33: #{tpu_custom_call.1} parent=1 // pred_fallthru
      _
    // Predicated region
    $region34: #{tpu_custom_call.1} parent=1 // pred_check
      _
    $region35: #{tpu_custom_call.1} parent=1 // pred_check_branch
      %68 = sbr.rel (0) target = $region37
    $region36: #{tpu_custom_call.1} parent=1 // pred_region
      %70 = dma.done [#allocation6], 2560
    $region37: #{tpu_custom_call.1} parent=1 // pred_fallthru
      _
    %v72 = vld [vmem:[%s0] sm:$0xff]
    %v73 = vld [vmem:[%s0 + $0x8] sm:$0xff]
    %v74 = vld [vmem:[%s0 + $0x10] sm:$0xff]
    %v75 = vld [vmem:[%s0 + $0x18] sm:$0xff]
    %v76 = vld [vmem:[%s2] sm:$0xff]
    %v77 = vld [vmem:[%s2 + $0x8] sm:$0x3]
    %v78 = vld [vmem:[%s1] sm:$0xff]
    %v79 = vld [vmem:[%s1 + $0x8] sm:$0xff]
    %v80 = vld [vmem:[%s1 + $0x10] sm:$0xff]
    %v81 = vld [vmem:[%s1 + $0x18] sm:$0xff]
    %vm82 = vcmask 80896
    %v84 = vsel %vm82, %v72, 0
    %v87 = vsel %vm82, %v73, 0
    %v90 = vsel %vm82, %v74, 0
    %v93 = vsel %vm82, %v75, 0
    %vm95 = vcmask 1041408
    %v97 = vsel %vm95, %v77, 0
    %99 = vmatpush.msra.mxu0 0.0
    %100 = vmatpush.msra.mxu0 0.0
    %101 = vmatpush.msra.mxu0 0.0
    %102 = vmatpush.msra.mxu0 0.0
    %103 = vmatpush.msra.mxu0 0.0
    %104 = vmatpush.msra.mxu0 0.0
    %105 = vmatpush.msra.mxu0 0.0
    %106 = vmatpush.msra.mxu0 0.0
    %107 = vmatpush.msra.mxu0 0.0
    %108 = vmatpush.msra.mxu0 0.0
    %109 = vmatpush.msra.mxu0 0.0
    %110 = vmatpush.msra.mxu0 0.0
    %111 = vmatpush.msra.mxu0 0.0
    %112 = vmatpush.msra.mxu0 0.0
    %113 = vmatpush.msra.mxu0 %v97
    %114 = vmatpush.msra.mxu0 %v76
    %115 = vmatmul.f32.gmra.mxu0 %v84
    %v116 = vpop.f32.mrf.mxu0
    %v117 = vadd.f32 %v78, %v116
    %118 = vmatmul.f32.gmra.mxu0 %v87
    %v119 = vpop.f32.mrf.mxu0
    %v120 = vadd.f32 %v79, %v119
    %121 = vmatmul.f32.gmra.mxu0 %v90
    %v122 = vpop.f32.mrf.mxu0
    %v123 = vadd.f32 %v80, %v122
    %124 = vmatmul.f32.gmra.mxu0 %v93
    %v125 = vpop.f32.mrf.mxu0
    %v126 = vadd.f32 %v81, %v125
    %127 = vdwg.mxu0
    %v128 = vld [vmem:[#allocation2] sm:$0xff]
    %v129 = vld [vmem:[#allocation2 + $0x8] sm:$0xff]
    %v130 = vld [vmem:[#allocation2 + $0x10] sm:$0xff]
    %v131 = vld [vmem:[#allocation2 + $0x18] sm:$0xff]
    %v132 = vld [vmem:[#allocation5] sm:$0xff]
    %v133 = vld [vmem:[#allocation5 + $0x8] sm:$0xff]
    %v134 = vld [vmem:[#allocation5 + $0x10] sm:$0xff]
    %v135 = vld [vmem:[#allocation5 + $0x18] sm:$0xff]
    %v136 = vld [vmem:[#allocation5 + $0x20] sm:$0xff]
    %v137 = vld [vmem:[#allocation5 + $0x28] sm:$0xff]
    %v138 = vld [vmem:[#allocation5 + $0x30] sm:$0xff]
    %v139 = vld [vmem:[#allocation5 + $0x38] sm:$0xff]
    %v140 = vld [vmem:[#allocation5 + $0x40] sm:$0xff]
    %v141 = vld [vmem:[#allocation7] sm:$0xf]
    %v142 = vld [vmem:[#allocation7 + $0x4] sm:$0xf]
    %v143 = vld [vmem:[#allocation7 + $0x8] sm:$0xf]
    %v144 = vld [vmem:[#allocation7 + $0xc] sm:$0xf]
    %v145 = vld [vmem:[#allocation7 + $0x10] sm:$0xf]
    %v146 = vld [vmem:[#allocation7 + $0x14] sm:$0xf]
    %v147 = vld [vmem:[#allocation7 + $0x18] sm:$0xf]
    %v148 = vld [vmem:[#allocation7 + $0x1c] sm:$0xf]
    %v149 = vld [vmem:[#allocation7 + $0x20] sm:$0xf]
    %v150 = vld [vmem:[#allocation7 + $0x24] sm:$0xf]
    %v151 = vld [vmem:[#allocation7 + $0x28] sm:$0xf]
    %v152 = vld [vmem:[#allocation7 + $0x2c] sm:$0xf]
    %v153 = vld [vmem:[#allocation7 + $0x30] sm:$0xf]
    %v154 = vld [vmem:[#allocation7 + $0x34] sm:$0xf]
    %v155 = vld [vmem:[#allocation7 + $0x38] sm:$0xf]
    %v156 = vld [vmem:[#allocation7 + $0x3c] sm:$0xf]
    %v157 = vld [vmem:[#allocation7 + $0x40] sm:$0xf]
    %v158 = vld [vmem:[#allocation7 + $0x44] sm:$0xf]
    %v159 = vld [vmem:[#allocation7 + $0x48] sm:$0xf]
    %v160 = vld [vmem:[#allocation7 + $0x4c] sm:$0xf]
    %vm161 = vcmask 261120
    %v162 = vsel %vm161, %v117, 0.0
    %163 = vadd.xlane.f32.xlu0 %v162
    %v164 = vpop.xlane.xlu0 %163
    %v165 = vsel %vm161, %v120, 0.0
    %166 = vadd.xlane.f32.xlu0 %v165
    %v167 = vpop.xlane.xlu0 %166
    %v168 = vsel %vm161, %v123, 0.0
    %169 = vadd.xlane.f32.xlu0 %v168
    %v170 = vpop.xlane.xlu0 %169
    %v171 = vsel %vm161, %v126, 0.0
    %172 = vadd.xlane.f32.xlu0 %v171
    %v173 = vpop.xlane.xlu0 %172
    %v174 = vrcp.pop 32.0
    %v175 = vmul.f32 32.0, %v174
    %v176 = vsub.f32 1.0, %v175
    %v177 = vmul.f32 %v174, %v176
    %v178 = vadd.f32 %v174, %v177
    %vm179 = vweird.f32 %v174
    %v180 = vsel %vm179, %v174, %v178
    %v181 = vmul.f32 %v164, %v180
    %v182 = vmul.f32 %v167, %v180
    %v183 = vmul.f32 %v170, %v180
    %v184 = vmul.f32 %v173, %v180
    %v185 = vsub.f32 %v117, %v181
    %v186 = vsub.f32 %v120, %v182
    %v187 = vsub.f32 %v123, %v183
    %v188 = vsub.f32 %v126, %v184
    %v189 = vmul.f32 %v185, %v185
    %v190 = vmul.f32 %v186, %v186
    %v191 = vmul.f32 %v187, %v187
    %v192 = vmul.f32 %v188, %v188
    %v193 = vsel %vm161, %v189, 0.0
    %194 = vadd.xlane.f32.xlu0 %v193
    %v195 = vpop.xlane.xlu0 %194
    %v196 = vsel %vm161, %v190, 0.0
    %197 = vadd.xlane.f32.xlu0 %v196
    %v198 = vpop.xlane.xlu0 %197
    %v199 = vsel %vm161, %v191, 0.0
    %200 = vadd.xlane.f32.xlu0 %v199
    %v201 = vpop.xlane.xlu0 %200
    %v202 = vsel %vm161, %v192, 0.0
    %203 = vadd.xlane.f32.xlu0 %v202
    %v204 = vpop.xlane.xlu0 %203
    %v205 = vmul.f32 %v195, %v180
    %v206 = vmul.f32 %v198, %v180
    %v207 = vmul.f32 %v201, %v180
    %v208 = vmul.f32 %v204, %v180
    %v209 = vadd.f32 %v205, 1e-05
    %v210 = vadd.f32 %v206, 1e-05
    %v211 = vadd.f32 %v207, 1e-05
    %v212 = vadd.f32 %v208, 1e-05
    %v213 = vrsqrt.pop %v209
    %v214 = vmul.f32 %v213, %v209
    %v215 = vmul.f32 %v214, %v213
    %v216 = vmul.f32 0.5, %v215
    %v217 = vsub.f32 1.5, %v216
    %v218 = vmul.f32 %v213, %v217
    %vm219 = vweird.f32 %v209
    %vm220 = vweird.f32 %v213
    %vm221 = vmor %vm219, %vm220
    %v222 = vsel %vm221, %v213, %v218
    %v223 = vrsqrt.pop %v210
    %v224 = vmul.f32 %v223, %v210
    %v225 = vmul.f32 %v224, %v223
    %v226 = vmul.f32 0.5, %v225
    %v227 = vsub.f32 1.5, %v226
    %v228 = vmul.f32 %v223, %v227
    %vm229 = vweird.f32 %v210
    %vm230 = vweird.f32 %v223
    %vm231 = vmor %vm229, %vm230
    %v232 = vsel %vm231, %v223, %v228
    %v233 = vrsqrt.pop %v211
    %v234 = vmul.f32 %v233, %v211
    %v235 = vmul.f32 %v234, %v233
    %v236 = vmul.f32 0.5, %v235
    %v237 = vsub.f32 1.5, %v236
    %v238 = vmul.f32 %v233, %v237
    %vm239 = vweird.f32 %v211
    %vm240 = vweird.f32 %v233
    %vm241 = vmor %vm239, %vm240
    %v242 = vsel %vm241, %v233, %v238
    %v243 = vrsqrt.pop %v212
    %v244 = vmul.f32 %v243, %v212
    %v245 = vmul.f32 %v244, %v243
    %v246 = vmul.f32 0.5, %v245
    %v247 = vsub.f32 1.5, %v246
    %v248 = vmul.f32 %v243, %v247
    %vm249 = vweird.f32 %v212
    %vm250 = vweird.f32 %v243
    %vm251 = vmor %vm249, %vm250
    %v252 = vsel %vm251, %v243, %v248
    %v253 = vmul.f32 %v185, %v222
    %v254 = vmul.f32 %v186, %v232
    %v255 = vmul.f32 %v187, %v242
    %v256 = vmul.f32 %v188, %v252
    %v257 = vperm.slane %v140, 0
    %v258 = vmul.f32 %v253, %v257
    %v259 = vmul.f32 %v254, %v257
    %v260 = vmul.f32 %v255, %v257
    %v261 = vmul.f32 %v256, %v257
    %v262 = vperm.slane %v140, 1
    %v263 = vadd.f32 %v258, %v262
    %v264 = vadd.f32 %v259, %v262
    %v265 = vadd.f32 %v260, %v262
    %v266 = vadd.f32 %v261, %v262
    %v268 = vsel %vm161, %v263, 0
    %v271 = vsel %vm161, %v264, 0
    %v274 = vsel %vm161, %v265, 0
    %v277 = vsel %vm161, %v266, 0
    %279 = vmatpush.msra.mxu0 0.0
    %280 = vmatpush.msra.mxu0 0.0
    %281 = vmatpush.msra.mxu0 0.0
    %282 = vmatpush.msra.mxu0 0.0
    %283 = vmatpush.msra.mxu0 0.0
    %284 = vmatpush.msra.mxu0 0.0
    %285 = vmatpush.msra.mxu0 0.0
    %286 = vmatpush.msra.mxu0 0.0
    %287 = vmatpush.msra.mxu0 0.0
    %288 = vmatpush.msra.mxu0 0.0
    %289 = vmatpush.msra.mxu0 0.0
    %290 = vmatpush.msra.mxu0 0.0
    %291 = vmatpush.msra.mxu0 %v135
    %292 = vmatpush.msra.mxu0 %v134
    %293 = vmatpush.msra.mxu0 %v133
    %294 = vmatpush.msra.mxu0 %v132
    %295 = vmatmul.f32.gmra.mxu0 %v268
    %v296 = vpop.f32.mrf.mxu0
    %v297 = vadd.f32 0.0, %v296
    %298 = vmatmul.f32.gmra.mxu0 %v271
    %v299 = vpop.f32.mrf.mxu0
    %v300 = vadd.f32 0.0, %v299
    %301 = vmatmul.f32.gmra.mxu0 %v274
    %v302 = vpop.f32.mrf.mxu0
    %v303 = vadd.f32 0.0, %v302
    %304 = vmatmul.f32.gmra.mxu0 %v277
    %v305 = vpop.f32.mrf.mxu0
    %v306 = vadd.f32 0.0, %v305
    %307 = vdwg.mxu0
    %312 = vrot.lane.b32.xlu0 %v297, 96
    %v313 = vpop.permute.xlu0 %312
    %314 = vrot.lane.b32.xlu0 %v300, 96
    %v315 = vpop.permute.xlu0 %314
    %316 = vrot.lane.b32.xlu0 %v303, 96
    %v317 = vpop.permute.xlu0 %316
    %318 = vrot.lane.b32.xlu0 %v306, 96
    %v319 = vpop.permute.xlu0 %318
    %vm320 = vcmask 64512
    %v321 = vsel %vm320, %v297, 0
    %v323 = vsel %vm320, %v300, 0
    %v325 = vsel %vm320, %v303, 0
    %v327 = vsel %vm320, %v306, 0
    %v329 = vsel %vm320, %v313, 0
    %v331 = vsel %vm320, %v315, 0
    %v333 = vsel %vm320, %v317, 0
    %v335 = vsel %vm320, %v319, 0
    %337 = vmatpush.xpose.msra.mxu0 0.0
    %338 = vmatpush.xpose.msra.mxu0 0.0
    %339 = vmatpush.xpose.msra.mxu0 0.0
    %340 = vmatpush.xpose.msra.mxu0 0.0
    %341 = vmatpush.xpose.msra.mxu0 0.0
    %342 = vmatpush.xpose.msra.mxu0 0.0
    %343 = vmatpush.xpose.msra.mxu0 0.0
    %344 = vmatpush.xpose.msra.mxu0 0.0
    %345 = vmatpush.xpose.msra.mxu0 0.0
    %346 = vmatpush.xpose.msra.mxu0 0.0
    %347 = vmatpush.xpose.msra.mxu0 0.0
    %348 = vmatpush.xpose.msra.mxu0 0.0
    %349 = vmatpush.xpose.msra.mxu0 %v335
    %350 = vmatpush.xpose.msra.mxu0 %v333
    %351 = vmatpush.xpose.msra.mxu0 %v331
    %352 = vmatpush.xpose.msra.mxu0 %v329
    %353 = vmatmul.f32.gmra.mxu0 %v321
    %v354 = vpop.f32.mrf.mxu0
    %v355 = vadd.f32 0.0, %v354
    %356 = vmatmul.f32.gmra.mxu0 %v323
    %v357 = vpop.f32.mrf.mxu0
    %v358 = vadd.f32 0.0, %v357
    %359 = vmatmul.f32.gmra.mxu0 %v325
    %v360 = vpop.f32.mrf.mxu0
    %v361 = vadd.f32 0.0, %v360
    %362 = vmatmul.f32.gmra.mxu0 %v327
    %v363 = vpop.f32.mrf.mxu0
    %v364 = vadd.f32 0.0, %v363
    %365 = vdwg.mxu0
    %v366 = vmul.f32 %v355, 0.35355338
    %v367 = vmul.f32 %v358, 0.35355338
    %v368 = vmul.f32 %v361, 0.35355338
    %v369 = vmul.f32 %v364, 0.35355338
    %v370 = vadd.f32 %v366, %v128
    %v371 = vadd.f32 %v367, %v129
    %v372 = vadd.f32 %v368, %v130
    %v373 = vadd.f32 %v369, %v131
    %v374 = vsel %vm161, %v370, -inf
    %375 = vmax.xlane.f32.xlu0 %v374
    %v376 = vpop.xlane.xlu0 %375
    %v377 = vsel %vm161, %v371, -inf
    %378 = vmax.xlane.f32.xlu0 %v377
    %v379 = vpop.xlane.xlu0 %378
    %v380 = vsel %vm161, %v372, -inf
    %381 = vmax.xlane.f32.xlu0 %v380
    %v382 = vpop.xlane.xlu0 %381
    %v383 = vsel %vm161, %v373, -inf
    %384 = vmax.xlane.f32.xlu0 %v383
    %v385 = vpop.xlane.xlu0 %384
    %v386 = vsub.f32 %v370, %v376
    %v387 = vsub.f32 %v371, %v379
    %v388 = vsub.f32 %v372, %v382
    %v389 = vsub.f32 %v373, %v385
    %v390 = vmul.f32 %v386, 1.442695
    %v391 = vpow.pop %v390
    %v392 = vmul.f32 %v387, 1.442695
    %v393 = vpow.pop %v392
    %v394 = vmul.f32 %v388, 1.442695
    %v395 = vpow.pop %v394
    %v396 = vmul.f32 %v389, 1.442695
    %v397 = vpow.pop %v396
    %v398 = vsel %vm161, %v391, 0.0
    %399 = vadd.xlane.f32.xlu0 %v398
    %v400 = vpop.xlane.xlu0 %399
    %v401 = vsel %vm161, %v393, 0.0
    %402 = vadd.xlane.f32.xlu0 %v401
    %v403 = vpop.xlane.xlu0 %402
    %v404 = vsel %vm161, %v395, 0.0
    %405 = vadd.xlane.f32.xlu0 %v404
    %v406 = vpop.xlane.xlu0 %405
    %v407 = vsel %vm161, %v397, 0.0
    %408 = vadd.xlane.f32.xlu0 %v407
    %v409 = vpop.xlane.xlu0 %408
    %v410 = vrcp.pop %v400
    %v411 = vrcp.pop %v403
    %v412 = vrcp.pop %v406
    %v413 = vrcp.pop %v409
    %v414 = vmul.f32 %v391, %v410
    %v415 = vmul.f32 %v393, %v411
    %v416 = vmul.f32 %v395, %v412
    %v417 = vmul.f32 %v397, %v413
    %418 = vrot.lane.b32.xlu0 %v297, 64
    %v419 = vpop.permute.xlu0 %418
    %420 = vrot.lane.b32.xlu0 %v300, 64
    %v421 = vpop.permute.xlu0 %420
    %422 = vrot.lane.b32.xlu0 %v303, 64
    %v423 = vpop.permute.xlu0 %422
    %424 = vrot.lane.b32.xlu0 %v306, 64
    %v425 = vpop.permute.xlu0 %424
    %v431 = vsel %vm161, %v414, 0
    %v434 = vsel %vm161, %v415, 0
    %v437 = vsel %vm161, %v416, 0
    %v440 = vsel %vm161, %v417, 0
    %442 = vmatpush.msra.mxu0 0.0
    %443 = vmatpush.msra.mxu0 0.0
    %444 = vmatpush.msra.mxu0 0.0
    %445 = vmatpush.msra.mxu0 0.0
    %446 = vmatpush.msra.mxu0 0.0
    %447 = vmatpush.msra.mxu0 0.0
    %448 = vmatpush.msra.mxu0 0.0
    %449 = vmatpush.msra.mxu0 0.0
    %450 = vmatpush.msra.mxu0 0.0
    %451 = vmatpush.msra.mxu0 0.0
    %452 = vmatpush.msra.mxu0 0.0
    %453 = vmatpush.msra.mxu0 0.0
    %454 = vmatpush.msra.mxu0 %v425
    %455 = vmatpush.msra.mxu0 %v423
    %456 = vmatpush.msra.mxu0 %v421
    %457 = vmatpush.msra.mxu0 %v419
    %458 = vmatmul.f32.gmra.mxu0 %v431
    %v459 = vpop.f32.mrf.mxu0
    %v460 = vadd.f32 0.0, %v459
    %461 = vmatmul.f32.gmra.mxu0 %v434
    %v462 = vpop.f32.mrf.mxu0
    %v463 = vadd.f32 0.0, %v462
    %464 = vmatmul.f32.gmra.mxu0 %v437
    %v465 = vpop.f32.mrf.mxu0
    %v466 = vadd.f32 0.0, %v465
    %467 = vmatmul.f32.gmra.mxu0 %v440
    %v468 = vpop.f32.mrf.mxu0
    %v469 = vadd.f32 0.0, %v468
    %470 = vdwg.mxu0
    %471 = vrot.lane.b32.xlu0 %v297, 120
    %v472 = vpop.permute.xlu0 %471
    %473 = vrot.lane.b32.xlu0 %v300, 120
    %v474 = vpop.permute.xlu0 %473
    %475 = vrot.lane.b32.xlu0 %v303, 120
    %v476 = vpop.permute.xlu0 %475
    %477 = vrot.lane.b32.xlu0 %v306, 120
    %v478 = vpop.permute.xlu0 %477
    %479 = vrot.lane.b32.xlu0 %v297, 88
    %v480 = vpop.permute.xlu0 %479
    %481 = vrot.lane.b32.xlu0 %v300, 88
    %v482 = vpop.permute.xlu0 %481
    %483 = vrot.lane.b32.xlu0 %v303, 88
    %v484 = vpop.permute.xlu0 %483
    %485 = vrot.lane.b32.xlu0 %v306, 88
    %v486 = vpop.permute.xlu0 %485
    %v487 = vsel %vm320, %v472, 0
    %v489 = vsel %vm320, %v474, 0
    %v491 = vsel %vm320, %v476, 0
    %v493 = vsel %vm320, %v478, 0
    %v495 = vsel %vm320, %v480, 0
    %v497 = vsel %vm320, %v482, 0
    %v499 = vsel %vm320, %v484, 0
    %v501 = vsel %vm320, %v486, 0
    %503 = vmatpush.xpose.msra.mxu0 0.0
    %504 = vmatpush.xpose.msra.mxu0 0.0
    %505 = vmatpush.xpose.msra.mxu0 0.0
    %506 = vmatpush.xpose.msra.mxu0 0.0
    %507 = vmatpush.xpose.msra.mxu0 0.0
    %508 = vmatpush.xpose.msra.mxu0 0.0
    %509 = vmatpush.xpose.msra.mxu0 0.0
    %510 = vmatpush.xpose.msra.mxu0 0.0
    %511 = vmatpush.xpose.msra.mxu0 0.0
    %512 = vmatpush.xpose.msra.mxu0 0.0
    %513 = vmatpush.xpose.msra.mxu0 0.0
    %514 = vmatpush.xpose.msra.mxu0 0.0
    %515 = vmatpush.xpose.msra.mxu0 %v501
    %516 = vmatpush.xpose.msra.mxu0 %v499
    %517 = vmatpush.xpose.msra.mxu0 %v497
    %518 = vmatpush.xpose.msra.mxu0 %v495
    %519 = vmatmul.f32.gmra.mxu0 %v487
    %v520 = vpop.f32.mrf.mxu0
    %v521 = vadd.f32 0.0, %v520
    %522 = vmatmul.f32.gmra.mxu0 %v489
    %v523 = vpop.f32.mrf.mxu0
    %v524 = vadd.f32 0.0, %v523
    %525 = vmatmul.f32.gmra.mxu0 %v491
    %v526 = vpop.f32.mrf.mxu0
    %v527 = vadd.f32 0.0, %v526
    %528 = vmatmul.f32.gmra.mxu0 %v493
    %v529 = vpop.f32.mrf.mxu0
    %v530 = vadd.f32 0.0, %v529
    %531 = vdwg.mxu0
    %v532 = vmul.f32 %v521, 0.35355338
    %v533 = vmul.f32 %v524, 0.35355338
    %v534 = vmul.f32 %v527, 0.35355338
    %v535 = vmul.f32 %v530, 0.35355338
    %v536 = vadd.f32 %v532, %v128
    %v537 = vadd.f32 %v533, %v129
    %v538 = vadd.f32 %v534, %v130
    %v539 = vadd.f32 %v535, %v131
    %v540 = vsel %vm161, %v536, -inf
    %541 = vmax.xlane.f32.xlu0 %v540
    %v542 = vpop.xlane.xlu0 %541
    %v543 = vsel %vm161, %v537, -inf
    %544 = vmax.xlane.f32.xlu0 %v543
    %v545 = vpop.xlane.xlu0 %544
    %v546 = vsel %vm161, %v538, -inf
    %547 = vmax.xlane.f32.xlu0 %v546
    %v548 = vpop.xlane.xlu0 %547
    %v549 = vsel %vm161, %v539, -inf
    %550 = vmax.xlane.f32.xlu0 %v549
    %v551 = vpop.xlane.xlu0 %550
    %v552 = vsub.f32 %v536, %v542
    %v553 = vsub.f32 %v537, %v545
    %v554 = vsub.f32 %v538, %v548
    %v555 = vsub.f32 %v539, %v551
    %v556 = vmul.f32 %v552, 1.442695
    %v557 = vpow.pop %v556
    %v558 = vmul.f32 %v553, 1.442695
    %v559 = vpow.pop %v558
    %v560 = vmul.f32 %v554, 1.442695
    %v561 = vpow.pop %v560
    %v562 = vmul.f32 %v555, 1.442695
    %v563 = vpow.pop %v562
    %v564 = vsel %vm161, %v557, 0.0
    %565 = vadd.xlane.f32.xlu0 %v564
    %v566 = vpop.xlane.xlu0 %565
    %v567 = vsel %vm161, %v559, 0.0
    %568 = vadd.xlane.f32.xlu0 %v567
    %v569 = vpop.xlane.xlu0 %568
    %v570 = vsel %vm161, %v561, 0.0
    %571 = vadd.xlane.f32.xlu0 %v570
    %v572 = vpop.xlane.xlu0 %571
    %v573 = vsel %vm161, %v563, 0.0
    %574 = vadd.xlane.f32.xlu0 %v573
    %v575 = vpop.xlane.xlu0 %574
    %v576 = vrcp.pop %v566
    %v577 = vrcp.pop %v569
    %v578 = vrcp.pop %v572
    %v579 = vrcp.pop %v575
    %v580 = vmul.f32 %v557, %v576
    %v581 = vmul.f32 %v559, %v577
    %v582 = vmul.f32 %v561, %v578
    %v583 = vmul.f32 %v563, %v579
    %584 = vrot.lane.b32.xlu0 %v297, 56
    %v585 = vpop.permute.xlu0 %584
    %586 = vrot.lane.b32.xlu0 %v300, 56
    %v587 = vpop.permute.xlu0 %586
    %588 = vrot.lane.b32.xlu0 %v303, 56
    %v589 = vpop.permute.xlu0 %588
    %590 = vrot.lane.b32.xlu0 %v306, 56
    %v591 = vpop.permute.xlu0 %590
    %v597 = vsel %vm161, %v580, 0
    %v600 = vsel %vm161, %v581, 0
    %v603 = vsel %vm161, %v582, 0
    %v606 = vsel %vm161, %v583, 0
    %608 = vmatpush.msra.mxu0 0.0
    %609 = vmatpush.msra.mxu0 0.0
    %610 = vmatpush.msra.mxu0 0.0
    %611 = vmatpush.msra.mxu0 0.0
    %612 = vmatpush.msra.mxu0 0.0
    %613 = vmatpush.msra.mxu0 0.0
    %614 = vmatpush.msra.mxu0 0.0
    %615 = vmatpush.msra.mxu0 0.0
    %616 = vmatpush.msra.mxu0 0.0
    %617 = vmatpush.msra.mxu0 0.0
    %618 = vmatpush.msra.mxu0 0.0
    %619 = vmatpush.msra.mxu0 0.0
    %620 = vmatpush.msra.mxu0 %v591
    %621 = vmatpush.msra.mxu0 %v589
    %622 = vmatpush.msra.mxu0 %v587
    %623 = vmatpush.msra.mxu0 %v585
    %624 = vmatmul.f32.gmra.mxu0 %v597
    %v625 = vpop.f32.mrf.mxu0
    %v626 = vadd.f32 0.0, %v625
    %627 = vmatmul.f32.gmra.mxu0 %v600
    %v628 = vpop.f32.mrf.mxu0
    %v629 = vadd.f32 0.0, %v628
    %630 = vmatmul.f32.gmra.mxu0 %v603
    %v631 = vpop.f32.mrf.mxu0
    %v632 = vadd.f32 0.0, %v631
    %633 = vmatmul.f32.gmra.mxu0 %v606
    %v634 = vpop.f32.mrf.mxu0
    %v635 = vadd.f32 0.0, %v634
    %636 = vdwg.mxu0
    %637 = vrot.lane.b32.xlu0 %v297, 112
    %v638 = vpop.permute.xlu0 %637
    %639 = vrot.lane.b32.xlu0 %v300, 112
    %v640 = vpop.permute.xlu0 %639
    %641 = vrot.lane.b32.xlu0 %v303, 112
    %v642 = vpop.permute.xlu0 %641
    %643 = vrot.lane.b32.xlu0 %v306, 112
    %v644 = vpop.permute.xlu0 %643
    %645 = vrot.lane.b32.xlu0 %v297, 80
    %v646 = vpop.permute.xlu0 %645
    %647 = vrot.lane.b32.xlu0 %v300, 80
    %v648 = vpop.permute.xlu0 %647
    %649 = vrot.lane.b32.xlu0 %v303, 80
    %v650 = vpop.permute.xlu0 %649
    %651 = vrot.lane.b32.xlu0 %v306, 80
    %v652 = vpop.permute.xlu0 %651
    %v653 = vsel %vm320, %v638, 0
    %v655 = vsel %vm320, %v640, 0
    %v657 = vsel %vm320, %v642, 0
    %v659 = vsel %vm320, %v644, 0
    %v661 = vsel %vm320, %v646, 0
    %v663 = vsel %vm320, %v648, 0
    %v665 = vsel %vm320, %v650, 0
    %v667 = vsel %vm320, %v652, 0
    %669 = vmatpush.xpose.msra.mxu0 0.0
    %670 = vmatpush.xpose.msra.mxu0 0.0
    %671 = vmatpush.xpose.msra.mxu0 0.0
    %672 = vmatpush.xpose.msra.mxu0 0.0
    %673 = vmatpush.xpose.msra.mxu0 0.0
    %674 = vmatpush.xpose.msra.mxu0 0.0
    %675 = vmatpush.xpose.msra.mxu0 0.0
    %676 = vmatpush.xpose.msra.mxu0 0.0
    %677 = vmatpush.xpose.msra.mxu0 0.0
    %678 = vmatpush.xpose.msra.mxu0 0.0
    %679 = vmatpush.xpose.msra.mxu0 0.0
    %680 = vmatpush.xpose.msra.mxu0 0.0
    %681 = vmatpush.xpose.msra.mxu0 %v667
    %682 = vmatpush.xpose.msra.mxu0 %v665
    %683 = vmatpush.xpose.msra.mxu0 %v663
    %684 = vmatpush.xpose.msra.mxu0 %v661
    %685 = vmatmul.f32.gmra.mxu0 %v653
    %v686 = vpop.f32.mrf.mxu0
    %v687 = vadd.f32 0.0, %v686
    %688 = vmatmul.f32.gmra.mxu0 %v655
    %v689 = vpop.f32.mrf.mxu0
    %v690 = vadd.f32 0.0, %v689
    %691 = vmatmul.f32.gmra.mxu0 %v657
    %v692 = vpop.f32.mrf.mxu0
    %v693 = vadd.f32 0.0, %v692
    %694 = vmatmul.f32.gmra.mxu0 %v659
    %v695 = vpop.f32.mrf.mxu0
    %v696 = vadd.f32 0.0, %v695
    %697 = vdwg.mxu0
    %v698 = vmul.f32 %v687, 0.35355338
    %v699 = vmul.f32 %v690, 0.35355338
    %v700 = vmul.f32 %v693, 0.35355338
    %v701 = vmul.f32 %v696, 0.35355338
    %v702 = vadd.f32 %v698, %v128
    %v703 = vadd.f32 %v699, %v129
    %v704 = vadd.f32 %v700, %v130
    %v705 = vadd.f32 %v701, %v131
    %v706 = vsel %vm161, %v702, -inf
    %707 = vmax.xlane.f32.xlu0 %v706
    %v708 = vpop.xlane.xlu0 %707
    %v709 = vsel %vm161, %v703, -inf
    %710 = vmax.xlane.f32.xlu0 %v709
    %v711 = vpop.xlane.xlu0 %710
    %v712 = vsel %vm161, %v704, -inf
    %713 = vmax.xlane.f32.xlu0 %v712
    %v714 = vpop.xlane.xlu0 %713
    %v715 = vsel %vm161, %v705, -inf
    %716 = vmax.xlane.f32.xlu0 %v715
    %v717 = vpop.xlane.xlu0 %716
    %v718 = vsub.f32 %v702, %v708
    %v719 = vsub.f32 %v703, %v711
    %v720 = vsub.f32 %v704, %v714
    %v721 = vsub.f32 %v705, %v717
    %v722 = vmul.f32 %v718, 1.442695
    %v723 = vpow.pop %v722
    %v724 = vmul.f32 %v719, 1.442695
    %v725 = vpow.pop %v724
    %v726 = vmul.f32 %v720, 1.442695
    %v727 = vpow.pop %v726
    %v728 = vmul.f32 %v721, 1.442695
    %v729 = vpow.pop %v728
    %v730 = vsel %vm161, %v723, 0.0
    %731 = vadd.xlane.f32.xlu0 %v730
    %v732 = vpop.xlane.xlu0 %731
    %v733 = vsel %vm161, %v725, 0.0
    %734 = vadd.xlane.f32.xlu0 %v733
    %v735 = vpop.xlane.xlu0 %734
    %v736 = vsel %vm161, %v727, 0.0
    %737 = vadd.xlane.f32.xlu0 %v736
    %v738 = vpop.xlane.xlu0 %737
    %v739 = vsel %vm161, %v729, 0.0
    %740 = vadd.xlane.f32.xlu0 %v739
    %v741 = vpop.xlane.xlu0 %740
    %v742 = vrcp.pop %v732
    %v743 = vrcp.pop %v735
    %v744 = vrcp.pop %v738
    %v745 = vrcp.pop %v741
    %v746 = vmul.f32 %v723, %v742
    %v747 = vmul.f32 %v725, %v743
    %v748 = vmul.f32 %v727, %v744
    %v749 = vmul.f32 %v729, %v745
    %750 = vrot.lane.b32.xlu0 %v297, 48
    %v751 = vpop.permute.xlu0 %750
    %752 = vrot.lane.b32.xlu0 %v300, 48
    %v753 = vpop.permute.xlu0 %752
    %754 = vrot.lane.b32.xlu0 %v303, 48
    %v755 = vpop.permute.xlu0 %754
    %756 = vrot.lane.b32.xlu0 %v306, 48
    %v757 = vpop.permute.xlu0 %756
    %v763 = vsel %vm161, %v746, 0
    %v766 = vsel %vm161, %v747, 0
    %v769 = vsel %vm161, %v748, 0
    %v772 = vsel %vm161, %v749, 0
    %774 = vmatpush.msra.mxu0 0.0
    %775 = vmatpush.msra.mxu0 0.0
    %776 = vmatpush.msra.mxu0 0.0
    %777 = vmatpush.msra.mxu0 0.0
    %778 = vmatpush.msra.mxu0 0.0
    %779 = vmatpush.msra.mxu0 0.0
    %780 = vmatpush.msra.mxu0 0.0
    %781 = vmatpush.msra.mxu0 0.0
    %782 = vmatpush.msra.mxu0 0.0
    %783 = vmatpush.msra.mxu0 0.0
    %784 = vmatpush.msra.mxu0 0.0
    %785 = vmatpush.msra.mxu0 0.0
    %786 = vmatpush.msra.mxu0 %v757
    %787 = vmatpush.msra.mxu0 %v755
    %788 = vmatpush.msra.mxu0 %v753
    %789 = vmatpush.msra.mxu0 %v751
    %790 = vmatmul.f32.gmra.mxu0 %v763
    %v791 = vpop.f32.mrf.mxu0
    %v792 = vadd.f32 0.0, %v791
    %793 = vmatmul.f32.gmra.mxu0 %v766
    %v794 = vpop.f32.mrf.mxu0
    %v795 = vadd.f32 0.0, %v794
    %796 = vmatmul.f32.gmra.mxu0 %v769
    %v797 = vpop.f32.mrf.mxu0
    %v798 = vadd.f32 0.0, %v797
    %799 = vmatmul.f32.gmra.mxu0 %v772
    %v800 = vpop.f32.mrf.mxu0
    %v801 = vadd.f32 0.0, %v800
    %802 = vdwg.mxu0
    %803 = vrot.lane.b32.xlu0 %v297, 104
    %v804 = vpop.permute.xlu0 %803
    %805 = vrot.lane.b32.xlu0 %v300, 104
    %v806 = vpop.permute.xlu0 %805
    %807 = vrot.lane.b32.xlu0 %v303, 104
    %v808 = vpop.permute.xlu0 %807
    %809 = vrot.lane.b32.xlu0 %v306, 104
    %v810 = vpop.permute.xlu0 %809
    %811 = vrot.lane.b32.xlu0 %v297, 72
    %v812 = vpop.permute.xlu0 %811
    %813 = vrot.lane.b32.xlu0 %v300, 72
    %v814 = vpop.permute.xlu0 %813
    %815 = vrot.lane.b32.xlu0 %v303, 72
    %v816 = vpop.permute.xlu0 %815
    %817 = vrot.lane.b32.xlu0 %v306, 72
    %v818 = vpop.permute.xlu0 %817
    %v819 = vsel %vm320, %v804, 0
    %v821 = vsel %vm320, %v806, 0
    %v823 = vsel %vm320, %v808, 0
    %v825 = vsel %vm320, %v810, 0
    %v827 = vsel %vm320, %v812, 0
    %v829 = vsel %vm320, %v814, 0
    %v831 = vsel %vm320, %v816, 0
    %v833 = vsel %vm320, %v818, 0
    %835 = vmatpush.xpose.msra.mxu0 0.0
    %836 = vmatpush.xpose.msra.mxu0 0.0
    %837 = vmatpush.xpose.msra.mxu0 0.0
    %838 = vmatpush.xpose.msra.mxu0 0.0
    %839 = vmatpush.xpose.msra.mxu0 0.0
    %840 = vmatpush.xpose.msra.mxu0 0.0
    %841 = vmatpush.xpose.msra.mxu0 0.0
    %842 = vmatpush.xpose.msra.mxu0 0.0
    %843 = vmatpush.xpose.msra.mxu0 0.0
    %844 = vmatpush.xpose.msra.mxu0 0.0
    %845 = vmatpush.xpose.msra.mxu0 0.0
    %846 = vmatpush.xpose.msra.mxu0 0.0
    %847 = vmatpush.xpose.msra.mxu0 %v833
    %848 = vmatpush.xpose.msra.mxu0 %v831
    %849 = vmatpush.xpose.msra.mxu0 %v829
    %850 = vmatpush.xpose.msra.mxu0 %v827
    %851 = vmatmul.f32.gmra.mxu0 %v819
    %v852 = vpop.f32.mrf.mxu0
    %v853 = vadd.f32 0.0, %v852
    %854 = vmatmul.f32.gmra.mxu0 %v821
    %v855 = vpop.f32.mrf.mxu0
    %v856 = vadd.f32 0.0, %v855
    %857 = vmatmul.f32.gmra.mxu0 %v823
    %v858 = vpop.f32.mrf.mxu0
    %v859 = vadd.f32 0.0, %v858
    %860 = vmatmul.f32.gmra.mxu0 %v825
    %v861 = vpop.f32.mrf.mxu0
    %v862 = vadd.f32 0.0, %v861
    %863 = vdwg.mxu0
    %v864 = vmul.f32 %v853, 0.35355338
    %v865 = vmul.f32 %v856, 0.35355338
    %v866 = vmul.f32 %v859, 0.35355338
    %v867 = vmul.f32 %v862, 0.35355338
    %v868 = vadd.f32 %v864, %v128
    %v869 = vadd.f32 %v865, %v129
    %v870 = vadd.f32 %v866, %v130
    %v871 = vadd.f32 %v867, %v131
    %v872 = vsel %vm161, %v868, -inf
    %873 = vmax.xlane.f32.xlu0 %v872
    %v874 = vpop.xlane.xlu0 %873
    %v875 = vsel %vm161, %v869, -inf
    %876 = vmax.xlane.f32.xlu0 %v875
    %v877 = vpop.xlane.xlu0 %876
    %v878 = vsel %vm161, %v870, -inf
    %879 = vmax.xlane.f32.xlu0 %v878
    %v880 = vpop.xlane.xlu0 %879
    %v881 = vsel %vm161, %v871, -inf
    %882 = vmax.xlane.f32.xlu0 %v881
    %v883 = vpop.xlane.xlu0 %882
    %v884 = vsub.f32 %v868, %v874
    %v885 = vsub.f32 %v869, %v877
    %v886 = vsub.f32 %v870, %v880
    %v887 = vsub.f32 %v871, %v883
    %v888 = vmul.f32 %v884, 1.442695
    %v889 = vpow.pop %v888
    %v890 = vmul.f32 %v885, 1.442695
    %v891 = vpow.pop %v890
    %v892 = vmul.f32 %v886, 1.442695
    %v893 = vpow.pop %v892
    %v894 = vmul.f32 %v887, 1.442695
    %v895 = vpow.pop %v894
    %v896 = vsel %vm161, %v889, 0.0
    %897 = vadd.xlane.f32.xlu0 %v896
    %v898 = vpop.xlane.xlu0 %897
    %v899 = vsel %vm161, %v891, 0.0
    %900 = vadd.xlane.f32.xlu0 %v899
    %v901 = vpop.xlane.xlu0 %900
    %v902 = vsel %vm161, %v893, 0.0
    %903 = vadd.xlane.f32.xlu0 %v902
    %v904 = vpop.xlane.xlu0 %903
    %v905 = vsel %vm161, %v895, 0.0
    %906 = vadd.xlane.f32.xlu0 %v905
    %v907 = vpop.xlane.xlu0 %906
    %v908 = vrcp.pop %v898
    %v909 = vrcp.pop %v901
    %v910 = vrcp.pop %v904
    %v911 = vrcp.pop %v907
    %v912 = vmul.f32 %v889, %v908
    %v913 = vmul.f32 %v891, %v909
    %v914 = vmul.f32 %v893, %v910
    %v915 = vmul.f32 %v895, %v911
    %916 = vrot.lane.b32.xlu0 %v297, 40
    %v917 = vpop.permute.xlu0 %916
    %918 = vrot.lane.b32.xlu0 %v300, 40
    %v919 = vpop.permute.xlu0 %918
    %920 = vrot.lane.b32.xlu0 %v303, 40
    %v921 = vpop.permute.xlu0 %920
    %922 = vrot.lane.b32.xlu0 %v306, 40
    %v923 = vpop.permute.xlu0 %922
    %v929 = vsel %vm161, %v912, 0
    %v932 = vsel %vm161, %v913, 0
    %v935 = vsel %vm161, %v914, 0
    %v938 = vsel %vm161, %v915, 0
    %940 = vmatpush.msra.mxu0 0.0
    %941 = vmatpush.msra.mxu0 0.0
    %942 = vmatpush.msra.mxu0 0.0
    %943 = vmatpush.msra.mxu0 0.0
    %944 = vmatpush.msra.mxu0 0.0
    %945 = vmatpush.msra.mxu0 0.0
    %946 = vmatpush.msra.mxu0 0.0
    %947 = vmatpush.msra.mxu0 0.0
    %948 = vmatpush.msra.mxu0 0.0
    %949 = vmatpush.msra.mxu0 0.0
    %950 = vmatpush.msra.mxu0 0.0
    %951 = vmatpush.msra.mxu0 0.0
    %952 = vmatpush.msra.mxu0 %v923
    %953 = vmatpush.msra.mxu0 %v921
    %954 = vmatpush.msra.mxu0 %v919
    %955 = vmatpush.msra.mxu0 %v917
    %956 = vmatmul.f32.gmra.mxu0 %v929
    %v957 = vpop.f32.mrf.mxu0
    %v958 = vadd.f32 0.0, %v957
    %959 = vmatmul.f32.gmra.mxu0 %v932
    %v960 = vpop.f32.mrf.mxu0
    %v961 = vadd.f32 0.0, %v960
    %962 = vmatmul.f32.gmra.mxu0 %v935
    %v963 = vpop.f32.mrf.mxu0
    %v964 = vadd.f32 0.0, %v963
    %965 = vmatmul.f32.gmra.mxu0 %v938
    %v966 = vpop.f32.mrf.mxu0
    %v967 = vadd.f32 0.0, %v966
    %968 = vdwg.mxu0
    %973 = vrot.lane.b32.xlu0 %v626, 8
    %v974 = vpop.permute.xlu0 %973
    %975 = vrot.lane.b32.xlu0 %v629, 8
    %v976 = vpop.permute.xlu0 %975
    %977 = vrot.lane.b32.xlu0 %v632, 8
    %v978 = vpop.permute.xlu0 %977
    %979 = vrot.lane.b32.xlu0 %v635, 8
    %v980 = vpop.permute.xlu0 %979
    %989 = vrot.lane.b32.xlu0 %v792, 16
    %v990 = vpop.permute.xlu0 %989
    %991 = vrot.lane.b32.xlu0 %v795, 16
    %v992 = vpop.permute.xlu0 %991
    %993 = vrot.lane.b32.xlu0 %v798, 16
    %v994 = vpop.permute.xlu0 %993
    %995 = vrot.lane.b32.xlu0 %v801, 16
    %v996 = vpop.permute.xlu0 %995
    %1005 = vrot.lane.b32.xlu0 %v958, 24
    %v1006 = vpop.permute.xlu0 %1005
    %1007 = vrot.lane.b32.xlu0 %v961, 24
    %v1008 = vpop.permute.xlu0 %1007
    %1009 = vrot.lane.b32.xlu0 %v964, 24
    %v1010 = vpop.permute.xlu0 %1009
    %1011 = vrot.lane.b32.xlu0 %v967, 24
    %v1012 = vpop.permute.xlu0 %1011
    %v1017 = vsel %vm320, %v460, %v974
    %v1018 = vsel %vm320, %v463, %v976
    %v1019 = vsel %vm320, %v466, %v978
    %v1020 = vsel %vm320, %v469, %v980
    %vm1021 = vcmask 130048
    %v1022 = vsel %vm1021, %v1017, %v990
    %v1023 = vsel %vm1021, %v1018, %v992
    %v1024 = vsel %vm1021, %v1019, %v994
    %v1025 = vsel %vm1021, %v1020, %v996
    %vm1026 = vcmask 195584
    %v1027 = vsel %vm1026, %v1022, %v1006
    %v1028 = vsel %vm1026, %v1023, %v1008
    %v1029 = vsel %vm1026, %v1024, %v1010
    %v1030 = vsel %vm1026, %v1025, %v1012
    %v1032 = vsel %vm161, %v1027, 0
    %v1035 = vsel %vm161, %v1028, 0
    %v1038 = vsel %vm161, %v1029, 0
    %v1041 = vsel %vm161, %v1030, 0
    %1043 = vmatpush.msra.mxu0 0.0
    %1044 = vmatpush.msra.mxu0 0.0
    %1045 = vmatpush.msra.mxu0 0.0
    %1046 = vmatpush.msra.mxu0 0.0
    %1047 = vmatpush.msra.mxu0 0.0
    %1048 = vmatpush.msra.mxu0 0.0
    %1049 = vmatpush.msra.mxu0 0.0
    %1050 = vmatpush.msra.mxu0 0.0
    %1051 = vmatpush.msra.mxu0 0.0
    %1052 = vmatpush.msra.mxu0 0.0
    %1053 = vmatpush.msra.mxu0 0.0
    %1054 = vmatpush.msra.mxu0 0.0
    %1055 = vmatpush.msra.mxu0 %v139
    %1056 = vmatpush.msra.mxu0 %v138
    %1057 = vmatpush.msra.mxu0 %v137
    %1058 = vmatpush.msra.mxu0 %v136
    %1059 = vmatmul.f32.gmra.mxu0 %v1032
    %v1060 = vpop.f32.mrf.mxu0
    %v1061 = vadd.f32 0.0, %v1060
    %1062 = vmatmul.f32.gmra.mxu0 %v1035
    %v1063 = vpop.f32.mrf.mxu0
    %v1064 = vadd.f32 0.0, %v1063
    %1065 = vmatmul.f32.gmra.mxu0 %v1038
    %v1066 = vpop.f32.mrf.mxu0
    %v1067 = vadd.f32 0.0, %v1066
    %1068 = vmatmul.f32.gmra.mxu0 %v1041
    %v1069 = vpop.f32.mrf.mxu0
    %v1070 = vadd.f32 0.0, %v1069
    %1071 = vdwg.mxu0
    %v1072 = vadd.f32 %v117, %v1061
    %v1073 = vadd.f32 %v120, %v1064
    %v1074 = vadd.f32 %v123, %v1067
    %v1075 = vadd.f32 %v126, %v1070
    %v1076 = vperm.slane %v140, 4
    %v1077 = vadd.f32 %v1072, %v1076
    %v1078 = vadd.f32 %v1073, %v1076
    %v1079 = vadd.f32 %v1074, %v1076
    %v1080 = vadd.f32 %v1075, %v1076
    %v1081 = vsel %vm161, %v1077, 0.0
    %1082 = vadd.xlane.f32.xlu0 %v1081
    %v1083 = vpop.xlane.xlu0 %1082
    %v1084 = vsel %vm161, %v1078, 0.0
    %1085 = vadd.xlane.f32.xlu0 %v1084
    %v1086 = vpop.xlane.xlu0 %1085
    %v1087 = vsel %vm161, %v1079, 0.0
    %1088 = vadd.xlane.f32.xlu0 %v1087
    %v1089 = vpop.xlane.xlu0 %1088
    %v1090 = vsel %vm161, %v1080, 0.0
    %1091 = vadd.xlane.f32.xlu0 %v1090
    %v1092 = vpop.xlane.xlu0 %1091
    %v1093 = vmul.f32 %v1083, %v180
    %v1094 = vmul.f32 %v1086, %v180
    %v1095 = vmul.f32 %v1089, %v180
    %v1096 = vmul.f32 %v1092, %v180
    %v1097 = vsub.f32 %v1077, %v1093
    %v1098 = vsub.f32 %v1078, %v1094
    %v1099 = vsub.f32 %v1079, %v1095
    %v1100 = vsub.f32 %v1080, %v1096
    %v1101 = vmul.f32 %v1097, %v1097
    %v1102 = vmul.f32 %v1098, %v1098
    %v1103 = vmul.f32 %v1099, %v1099
    %v1104 = vmul.f32 %v1100, %v1100
    %v1105 = vsel %vm161, %v1101, 0.0
    %1106 = vadd.xlane.f32.xlu0 %v1105
    %v1107 = vpop.xlane.xlu0 %1106
    %v1108 = vsel %vm161, %v1102, 0.0
    %1109 = vadd.xlane.f32.xlu0 %v1108
    %v1110 = vpop.xlane.xlu0 %1109
    %v1111 = vsel %vm161, %v1103, 0.0
    %1112 = vadd.xlane.f32.xlu0 %v1111
    %v1113 = vpop.xlane.xlu0 %1112
    %v1114 = vsel %vm161, %v1104, 0.0
    %1115 = vadd.xlane.f32.xlu0 %v1114
    %v1116 = vpop.xlane.xlu0 %1115
    %v1117 = vmul.f32 %v1107, %v180
    %v1118 = vmul.f32 %v1110, %v180
    %v1119 = vmul.f32 %v1113, %v180
    %v1120 = vmul.f32 %v1116, %v180
    %v1121 = vadd.f32 %v1117, 1e-05
    %v1122 = vadd.f32 %v1118, 1e-05
    %v1123 = vadd.f32 %v1119, 1e-05
    %v1124 = vadd.f32 %v1120, 1e-05
    %v1125 = vrsqrt.pop %v1121
    %v1126 = vmul.f32 %v1125, %v1121
    %v1127 = vmul.f32 %v1126, %v1125
    %v1128 = vmul.f32 0.5, %v1127
    %v1129 = vsub.f32 1.5, %v1128
    %v1130 = vmul.f32 %v1125, %v1129
    %vm1131 = vweird.f32 %v1121
    %vm1132 = vweird.f32 %v1125
    %vm1133 = vmor %vm1131, %vm1132
    %v1134 = vsel %vm1133, %v1125, %v1130
    %v1135 = vrsqrt.pop %v1122
    %v1136 = vmul.f32 %v1135, %v1122
    %v1137 = vmul.f32 %v1136, %v1135
    %v1138 = vmul.f32 0.5, %v1137
    %v1139 = vsub.f32 1.5, %v1138
    %v1140 = vmul.f32 %v1135, %v1139
    %vm1141 = vweird.f32 %v1122
    %vm1142 = vweird.f32 %v1135
    %vm1143 = vmor %vm1141, %vm1142
    %v1144 = vsel %vm1143, %v1135, %v1140
    %v1145 = vrsqrt.pop %v1123
    %v1146 = vmul.f32 %v1145, %v1123
    %v1147 = vmul.f32 %v1146, %v1145
    %v1148 = vmul.f32 0.5, %v1147
    %v1149 = vsub.f32 1.5, %v1148
    %v1150 = vmul.f32 %v1145, %v1149
    %vm1151 = vweird.f32 %v1123
    %vm1152 = vweird.f32 %v1145
    %vm1153 = vmor %vm1151, %vm1152
    %v1154 = vsel %vm1153, %v1145, %v1150
    %v1155 = vrsqrt.pop %v1124
    %v1156 = vmul.f32 %v1155, %v1124
    %v1157 = vmul.f32 %v1156, %v1155
    %v1158 = vmul.f32 0.5, %v1157
    %v1159 = vsub.f32 1.5, %v1158
    %v1160 = vmul.f32 %v1155, %v1159
    %vm1161 = vweird.f32 %v1124
    %vm1162 = vweird.f32 %v1155
    %vm1163 = vmor %vm1161, %vm1162
    %v1164 = vsel %vm1163, %v1155, %v1160
    %v1165 = vmul.f32 %v1097, %v1134
    %v1166 = vmul.f32 %v1098, %v1144
    %v1167 = vmul.f32 %v1099, %v1154
    %v1168 = vmul.f32 %v1100, %v1164
    %v1169 = vperm.slane %v140, 2
    %v1170 = vmul.f32 %v1165, %v1169
    %v1171 = vmul.f32 %v1166, %v1169
    %v1172 = vmul.f32 %v1167, %v1169
    %v1173 = vmul.f32 %v1168, %v1169
    %v1174 = vperm.slane %v140, 3
    %v1175 = vadd.f32 %v1170, %v1174
    %v1176 = vadd.f32 %v1171, %v1174
    %v1177 = vadd.f32 %v1172, %v1174
    %v1178 = vadd.f32 %v1173, %v1174
    %v1179 = vpack.c.bf16 %v1176, %v1175
    %v1180 = vpack.c.bf16 %v1178, %v1177
    %v1181 = vperm.slane %v140, 6
    %v1186 = vunpack.c.l.b16 %v141
    %v1187 = vunpack.c.l.b16 %v142
    %v1188 = vunpack.c.l.b16 %v143
    %v1189 = vunpack.c.l.b16 %v144
    %v1190 = vpack.c.b16 %v1187, %v1186
    %v1191 = vpack.c.b16 %v1189, %v1188
    %v1195 = vsel %vm161, %v1179, 0
    %v1198 = vsel %vm161, %v1180, 0
    %1200 = vmatpush.bf16.msra.mxu0 0
    %1201 = vmatpush.bf16.msra.mxu0 0
    %1202 = vmatpush.bf16.msra.mxu0 0
    %1203 = vmatpush.bf16.msra.mxu0 0
    %1204 = vmatpush.bf16.msra.mxu0 0
    %1205 = vmatpush.bf16.msra.mxu0 0
    %1206 = vmatpush.bf16.msra.mxu0 %v1191
    %1207 = vmatpush.bf16.msra.mxu0 %v1190
    %1208 = vmatmul.bf16.gmra.mxu0 %v1195
    %v1209 = vpop.f32.mrf.mxu0
    %v1210 = vadd.f32 %v1181, %v1209
    %v1211 = vpop.f32.mrf.mxu0
    %v1212 = vadd.f32 %v1181, %v1211
    %1213 = vmatmul.bf16.gmra.mxu0 %v1198
    %v1214 = vpop.f32.mrf.mxu0
    %v1215 = vadd.f32 %v1181, %v1214
    %v1216 = vpop.f32.mrf.mxu0
    %v1217 = vadd.f32 %v1181, %v1216
    %1218 = vdwg.mxu0
    %v1219 = vxor.u32 %v1210, 2147483648
    %v1220 = vxor.u32 %v1212, 2147483648
    %v1221 = vxor.u32 %v1215, 2147483648
    %v1222 = vxor.u32 %v1217, 2147483648
    %v1223 = vmul.f32 %v1219, 1.442695
    %v1224 = vpow.pop %v1223
    %v1225 = vmul.f32 %v1220, 1.442695
    %v1226 = vpow.pop %v1225
    %v1227 = vmul.f32 %v1221, 1.442695
    %v1228 = vpow.pop %v1227
    %v1229 = vmul.f32 %v1222, 1.442695
    %v1230 = vpow.pop %v1229
    %v1231 = vadd.f32 %v1224, 1.0
    %v1232 = vadd.f32 %v1226, 1.0
    %v1233 = vadd.f32 %v1228, 1.0
    %v1234 = vadd.f32 %v1230, 1.0
    %v1235 = vrcp.pop %v1231
    %v1236 = vmul.f32 %v1231, %v1235
    %v1237 = vsub.f32 1.0, %v1236
    %v1238 = vmul.f32 %v1235, %v1237
    %v1239 = vadd.f32 %v1235, %v1238
    %vm1240 = vweird.f32 %v1231
    %vm1241 = vweird.f32 %v1235
    %vm1242 = vmor %vm1240, %vm1241
    %v1243 = vsel %vm1242, %v1235, %v1239
    %v1244 = vand.u32 2147483647, %v1231
    %vm1245 = vcmp.eq.f32.partialorder %v1244, 8.507059e+37
    %v1246 = vand.u32 %v1231, 2147483648
    %v1247 = vor.u32 1.1754944e-38, %v1246
    %v1248 = vsel %vm1245, %v1247, %v1243
    %v1249 = vmul.f32 1.0, %v1248
    %v1250 = vrcp.pop %v1232
    %v1251 = vmul.f32 %v1232, %v1250
    %v1252 = vsub.f32 1.0, %v1251
    %v1253 = vmul.f32 %v1250, %v1252
    %v1254 = vadd.f32 %v1250, %v1253
    %vm1255 = vweird.f32 %v1232
    %vm1256 = vweird.f32 %v1250
    %vm1257 = vmor %vm1255, %vm1256
    %v1258 = vsel %vm1257, %v1250, %v1254
    %v1259 = vand.u32 2147483647, %v1232
    %vm1260 = vcmp.eq.f32.partialorder %v1259, 8.507059e+37
    %v1261 = vand.u32 %v1232, 2147483648
    %v1262 = vor.u32 1.1754944e-38, %v1261
    %v1263 = vsel %vm1260, %v1262, %v1258
    %v1264 = vmul.f32 1.0, %v1263
    %v1265 = vrcp.pop %v1233
    %v1266 = vmul.f32 %v1233, %v1265
    %v1267 = vsub.f32 1.0, %v1266
    %v1268 = vmul.f32 %v1265, %v1267
    %v1269 = vadd.f32 %v1265, %v1268
    %vm1270 = vweird.f32 %v1233
    %vm1271 = vweird.f32 %v1265
    %vm1272 = vmor %vm1270, %vm1271
    %v1273 = vsel %vm1272, %v1265, %v1269
    %v1274 = vand.u32 2147483647, %v1233
    %vm1275 = vcmp.eq.f32.partialorder %v1274, 8.507059e+37
    %v1276 = vand.u32 %v1233, 2147483648
    %v1277 = vor.u32 1.1754944e-38, %v1276
    %v1278 = vsel %vm1275, %v1277, %v1273
    %v1279 = vmul.f32 1.0, %v1278
    %v1280 = vrcp.pop %v1234
    %v1281 = vmul.f32 %v1234, %v1280
    %v1282 = vsub.f32 1.0, %v1281
    %v1283 = vmul.f32 %v1280, %v1282
    %v1284 = vadd.f32 %v1280, %v1283
    %vm1285 = vweird.f32 %v1234
    %vm1286 = vweird.f32 %v1280
    %vm1287 = vmor %vm1285, %vm1286
    %v1288 = vsel %vm1287, %v1280, %v1284
    %v1289 = vand.u32 2147483647, %v1234
    %vm1290 = vcmp.eq.f32.partialorder %v1289, 8.507059e+37
    %v1291 = vand.u32 %v1234, 2147483648
    %v1292 = vor.u32 1.1754944e-38, %v1291
    %v1293 = vsel %vm1290, %v1292, %v1288
    %v1294 = vmul.f32 1.0, %v1293
    %v1295 = vmul.f32 %v1210, %v1249
    %v1296 = vmul.f32 %v1212, %v1264
    %v1297 = vmul.f32 %v1215, %v1279
    %v1298 = vmul.f32 %v1217, %v1294
    %v1299 = vpack.c.bf16 %v1296, %v1295
    %v1300 = vpack.c.bf16 %v1298, %v1297
    %v1301 = vperm.slane %v140, 5
    %v1318 = vunpack.c.l.b16 %v145
    %v1319 = vunpack.c.l.b16 %v146
    %v1320 = vunpack.c.l.b16 %v147
    %v1321 = vunpack.c.l.b16 %v148
    %v1322 = vunpack.c.l.b16 %v149
    %v1323 = vunpack.c.l.b16 %v150
    %v1324 = vunpack.c.l.b16 %v151
    %v1325 = vunpack.c.l.b16 %v152
    %v1326 = vunpack.c.l.b16 %v153
    %v1327 = vunpack.c.l.b16 %v154
    %v1328 = vunpack.c.l.b16 %v155
    %v1329 = vunpack.c.l.b16 %v156
    %v1330 = vunpack.c.l.b16 %v157
    %v1331 = vunpack.c.l.b16 %v158
    %v1332 = vunpack.c.l.b16 %v159
    %v1333 = vunpack.c.l.b16 %v160
    %v1334 = vpack.c.b16 %v1319, %v1318
    %v1335 = vpack.c.b16 %v1321, %v1320
    %v1336 = vpack.c.b16 %v1323, %v1322
    %v1337 = vpack.c.b16 %v1325, %v1324
    %v1338 = vpack.c.b16 %v1327, %v1326
    %v1339 = vpack.c.b16 %v1329, %v1328
    %v1340 = vpack.c.b16 %v1331, %v1330
    %v1341 = vpack.c.b16 %v1333, %v1332
    %1350 = vmatpush.bf16.msra.mxu0 %v1341
    %1351 = vmatpush.bf16.msra.mxu0 %v1340
    %1352 = vmatpush.bf16.msra.mxu0 %v1339
    %1353 = vmatpush.bf16.msra.mxu0 %v1338
    %1354 = vmatpush.bf16.msra.mxu0 %v1337
    %1355 = vmatpush.bf16.msra.mxu0 %v1336
    %1356 = vmatpush.bf16.msra.mxu0 %v1335
    %1357 = vmatpush.bf16.msra.mxu0 %v1334
    %1358 = vmatmul.bf16.gmra.mxu0 %v1299
    %v1359 = vpop.f32.mrf.mxu0
    %v1360 = vadd.f32 %v1301, %v1359
    %v1361 = vpop.f32.mrf.mxu0
    %v1362 = vadd.f32 %v1301, %v1361
    %1363 = vmatmul.bf16.gmra.mxu0 %v1300
    %v1364 = vpop.f32.mrf.mxu0
    %v1365 = vadd.f32 %v1301, %v1364
    %v1366 = vpop.f32.mrf.mxu0
    %v1367 = vadd.f32 %v1301, %v1366
    %1368 = vdwg.mxu0
    %v1369 = vadd.f32 %v1077, %v1360
    %v1370 = vadd.f32 %v1078, %v1362
    %v1371 = vadd.f32 %v1079, %v1365
    %v1372 = vadd.f32 %v1080, %v1367
    %s1373 = scalar_lea.vmem [#allocation5], 72
    %v1374 = vld [vmem:[%s1373] sm:$0xff]
    %v1375 = vld [vmem:[%s1373 + $0x8] sm:$0xff]
    %v1376 = vld [vmem:[%s1373 + $0x10] sm:$0xff]
    %v1377 = vld [vmem:[%s1373 + $0x18] sm:$0xff]
    %v1378 = vld [vmem:[%s1373 + $0x20] sm:$0xff]
    %v1379 = vld [vmem:[%s1373 + $0x28] sm:$0xff]
    %v1380 = vld [vmem:[%s1373 + $0x30] sm:$0xff]
    %v1381 = vld [vmem:[%s1373 + $0x38] sm:$0xff]
    %v1382 = vld [vmem:[%s1373 + $0x40] sm:$0xff]
    %s1383 = scalar_lea.vmem [#allocation7], 80
    %v1384 = vld [vmem:[%s1383] sm:$0xf]
    %v1385 = vld [vmem:[%s1383 + $0x4] sm:$0xf]
    %v1386 = vld [vmem:[%s1383 + $0x8] sm:$0xf]
    %v1387 = vld [vmem:[%s1383 + $0xc] sm:$0xf]
    %v1388 = vld [vmem:[%s1383 + $0x10] sm:$0xf]
    %v1389 = vld [vmem:[%s1383 + $0x14] sm:$0xf]
    %v1390 = vld [vmem:[%s1383 + $0x18] sm:$0xf]
    %v1391 = vld [vmem:[%s1383 + $0x1c] sm:$0xf]
    %v1392 = vld [vmem:[%s1383 + $0x20] sm:$0xf]
    %v1393 = vld [vmem:[%s1383 + $0x24] sm:$0xf]
    %v1394 = vld [vmem:[%s1383 + $0x28] sm:$0xf]
    %v1395 = vld [vmem:[%s1383 + $0x2c] sm:$0xf]
    %v1396 = vld [vmem:[%s1383 + $0x30] sm:$0xf]
    %v1397 = vld [vmem:[%s1383 + $0x34] sm:$0xf]
    %v1398 = vld [vmem:[%s1383 + $0x38] sm:$0xf]
    %v1399 = vld [vmem:[%s1383 + $0x3c] sm:$0xf]
    %v1400 = vld [vmem:[%s1383 + $0x40] sm:$0xf]
    %v1401 = vld [vmem:[%s1383 + $0x44] sm:$0xf]
    %v1402 = vld [vmem:[%s1383 + $0x48] sm:$0xf]
    %v1403 = vld [vmem:[%s1383 + $0x4c] sm:$0xf]
    %v1404 = vsel %vm161, %v1369, 0.0
    %1405 = vadd.xlane.f32.xlu0 %v1404
    %v1406 = vpop.xlane.xlu0 %1405
    %v1407 = vsel %vm161, %v1370, 0.0
    %1408 = vadd.xlane.f32.xlu0 %v1407
    %v1409 = vpop.xlane.xlu0 %1408
    %v1410 = vsel %vm161, %v1371, 0.0
    %1411 = vadd.xlane.f32.xlu0 %v1410
    %v1412 = vpop.xlane.xlu0 %1411
    %v1413 = vsel %vm161, %v1372, 0.0
    %1414 = vadd.xlane.f32.xlu0 %v1413
    %v1415 = vpop.xlane.xlu0 %1414
    %v1416 = vmul.f32 %v1406, %v180
    %v1417 = vmul.f32 %v1409, %v180
    %v1418 = vmul.f32 %v1412, %v180
    %v1419 = vmul.f32 %v1415, %v180
    %v1420 = vsub.f32 %v1369, %v1416
    %v1421 = vsub.f32 %v1370, %v1417
    %v1422 = vsub.f32 %v1371, %v1418
    %v1423 = vsub.f32 %v1372, %v1419
    %v1424 = vmul.f32 %v1420, %v1420
    %v1425 = vmul.f32 %v1421, %v1421
    %v1426 = vmul.f32 %v1422, %v1422
    %v1427 = vmul.f32 %v1423, %v1423
    %v1428 = vsel %vm161, %v1424, 0.0
    %1429 = vadd.xlane.f32.xlu0 %v1428
    %v1430 = vpop.xlane.xlu0 %1429
    %v1431 = vsel %vm161, %v1425, 0.0
    %1432 = vadd.xlane.f32.xlu0 %v1431
    %v1433 = vpop.xlane.xlu0 %1432
    %v1434 = vsel %vm161, %v1426, 0.0
    %1435 = vadd.xlane.f32.xlu0 %v1434
    %v1436 = vpop.xlane.xlu0 %1435
    %v1437 = vsel %vm161, %v1427, 0.0
    %1438 = vadd.xlane.f32.xlu0 %v1437
    %v1439 = vpop.xlane.xlu0 %1438
    %v1440 = vmul.f32 %v1430, %v180
    %v1441 = vmul.f32 %v1433, %v180
    %v1442 = vmul.f32 %v1436, %v180
    %v1443 = vmul.f32 %v1439, %v180
    %v1444 = vadd.f32 %v1440, 1e-05
    %v1445 = vadd.f32 %v1441, 1e-05
    %v1446 = vadd.f32 %v1442, 1e-05
    %v1447 = vadd.f32 %v1443, 1e-05
    %v1448 = vrsqrt.pop %v1444
    %v1449 = vmul.f32 %v1448, %v1444
    %v1450 = vmul.f32 %v1449, %v1448
    %v1451 = vmul.f32 0.5, %v1450
    %v1452 = vsub.f32 1.5, %v1451
    %v1453 = vmul.f32 %v1448, %v1452
    %vm1454 = vweird.f32 %v1444
    %vm1455 = vweird.f32 %v1448
    %vm1456 = vmor %vm1454, %vm1455
    %v1457 = vsel %vm1456, %v1448, %v1453
    %v1458 = vrsqrt.pop %v1445
    %v1459 = vmul.f32 %v1458, %v1445
    %v1460 = vmul.f32 %v1459, %v1458
    %v1461 = vmul.f32 0.5, %v1460
    %v1462 = vsub.f32 1.5, %v1461
    %v1463 = vmul.f32 %v1458, %v1462
    %vm1464 = vweird.f32 %v1445
    %vm1465 = vweird.f32 %v1458
    %vm1466 = vmor %vm1464, %vm1465
    %v1467 = vsel %vm1466, %v1458, %v1463
    %v1468 = vrsqrt.pop %v1446
    %v1469 = vmul.f32 %v1468, %v1446
    %v1470 = vmul.f32 %v1469, %v1468
    %v1471 = vmul.f32 0.5, %v1470
    %v1472 = vsub.f32 1.5, %v1471
    %v1473 = vmul.f32 %v1468, %v1472
    %vm1474 = vweird.f32 %v1446
    %vm1475 = vweird.f32 %v1468
    %vm1476 = vmor %vm1474, %vm1475
    %v1477 = vsel %vm1476, %v1468, %v1473
    %v1478 = vrsqrt.pop %v1447
    %v1479 = vmul.f32 %v1478, %v1447
    %v1480 = vmul.f32 %v1479, %v1478
    %v1481 = vmul.f32 0.5, %v1480
    %v1482 = vsub.f32 1.5, %v1481
    %v1483 = vmul.f32 %v1478, %v1482
    %vm1484 = vweird.f32 %v1447
    %vm1485 = vweird.f32 %v1478
    %vm1486 = vmor %vm1484, %vm1485
    %v1487 = vsel %vm1486, %v1478, %v1483
    %v1488 = vmul.f32 %v1420, %v1457
    %v1489 = vmul.f32 %v1421, %v1467
    %v1490 = vmul.f32 %v1422, %v1477
    %v1491 = vmul.f32 %v1423, %v1487
    %v1492 = vperm.slane %v1382, 0
    %v1493 = vmul.f32 %v1488, %v1492
    %v1494 = vmul.f32 %v1489, %v1492
    %v1495 = vmul.f32 %v1490, %v1492
    %v1496 = vmul.f32 %v1491, %v1492
    %v1497 = vperm.slane %v1382, 1
    %v1498 = vadd.f32 %v1493, %v1497
    %v1499 = vadd.f32 %v1494, %v1497
    %v1500 = vadd.f32 %v1495, %v1497
    %v1501 = vadd.f32 %v1496, %v1497
    %v1503 = vsel %vm161, %v1498, 0
    %v1506 = vsel %vm161, %v1499, 0
    %v1509 = vsel %vm161, %v1500, 0
    %v1512 = vsel %vm161, %v1501, 0
    %1514 = vmatpush.msra.mxu0 0.0
    %1515 = vmatpush.msra.mxu0 0.0
    %1516 = vmatpush.msra.mxu0 0.0
    %1517 = vmatpush.msra.mxu0 0.0
    %1518 = vmatpush.msra.mxu0 0.0
    %1519 = vmatpush.msra.mxu0 0.0
    %1520 = vmatpush.msra.mxu0 0.0
    %1521 = vmatpush.msra.mxu0 0.0
    %1522 = vmatpush.msra.mxu0 0.0
    %1523 = vmatpush.msra.mxu0 0.0
    %1524 = vmatpush.msra.mxu0 0.0
    %1525 = vmatpush.msra.mxu0 0.0
    %1526 = vmatpush.msra.mxu0 %v1377
    %1527 = vmatpush.msra.mxu0 %v1376
    %1528 = vmatpush.msra.mxu0 %v1375
    %1529 = vmatpush.msra.mxu0 %v1374
    %1530 = vmatmul.f32.gmra.mxu0 %v1503
    %v1531 = vpop.f32.mrf.mxu0
    %v1532 = vadd.f32 0.0, %v1531
    %1533 = vmatmul.f32.gmra.mxu0 %v1506
    %v1534 = vpop.f32.mrf.mxu0
    %v1535 = vadd.f32 0.0, %v1534
    %1536 = vmatmul.f32.gmra.mxu0 %v1509
    %v1537 = vpop.f32.mrf.mxu0
    %v1538 = vadd.f32 0.0, %v1537
    %1539 = vmatmul.f32.gmra.mxu0 %v1512
    %v1540 = vpop.f32.mrf.mxu0
    %v1541 = vadd.f32 0.0, %v1540
    %1542 = vdwg.mxu0
    %1547 = vrot.lane.b32.xlu0 %v1532, 96
    %v1548 = vpop.permute.xlu0 %1547
    %1549 = vrot.lane.b32.xlu0 %v1535, 96
    %v1550 = vpop.permute.xlu0 %1549
    %1551 = vrot.lane.b32.xlu0 %v1538, 96
    %v1552 = vpop.permute.xlu0 %1551
    %1553 = vrot.lane.b32.xlu0 %v1541, 96
    %v1554 = vpop.permute.xlu0 %1553
    %v1555 = vsel %vm320, %v1532, 0
    %v1557 = vsel %vm320, %v1535, 0
    %v1559 = vsel %vm320, %v1538, 0
    %v1561 = vsel %vm320, %v1541, 0
    %v1563 = vsel %vm320, %v1548, 0
    %v1565 = vsel %vm320, %v1550, 0
    %v1567 = vsel %vm320, %v1552, 0
    %v1569 = vsel %vm320, %v1554, 0
    %1571 = vmatpush.xpose.msra.mxu0 0.0
    %1572 = vmatpush.xpose.msra.mxu0 0.0
    %1573 = vmatpush.xpose.msra.mxu0 0.0
    %1574 = vmatpush.xpose.msra.mxu0 0.0
    %1575 = vmatpush.xpose.msra.mxu0 0.0
    %1576 = vmatpush.xpose.msra.mxu0 0.0
    %1577 = vmatpush.xpose.msra.mxu0 0.0
    %1578 = vmatpush.xpose.msra.mxu0 0.0
    %1579 = vmatpush.xpose.msra.mxu0 0.0
    %1580 = vmatpush.xpose.msra.mxu0 0.0
    %1581 = vmatpush.xpose.msra.mxu0 0.0
    %1582 = vmatpush.xpose.msra.mxu0 0.0
    %1583 = vmatpush.xpose.msra.mxu0 %v1569
    %1584 = vmatpush.xpose.msra.mxu0 %v1567
    %1585 = vmatpush.xpose.msra.mxu0 %v1565
    %1586 = vmatpush.xpose.msra.mxu0 %v1563
    %1587 = vmatmul.f32.gmra.mxu0 %v1555
    %v1588 = vpop.f32.mrf.mxu0
    %v1589 = vadd.f32 0.0, %v1588
    %1590 = vmatmul.f32.gmra.mxu0 %v1557
    %v1591 = vpop.f32.mrf.mxu0
    %v1592 = vadd.f32 0.0, %v1591
    %1593 = vmatmul.f32.gmra.mxu0 %v1559
    %v1594 = vpop.f32.mrf.mxu0
    %v1595 = vadd.f32 0.0, %v1594
    %1596 = vmatmul.f32.gmra.mxu0 %v1561
    %v1597 = vpop.f32.mrf.mxu0
    %v1598 = vadd.f32 0.0, %v1597
    %1599 = vdwg.mxu0
    %v1600 = vmul.f32 %v1589, 0.35355338
    %v1601 = vmul.f32 %v1592, 0.35355338
    %v1602 = vmul.f32 %v1595, 0.35355338
    %v1603 = vmul.f32 %v1598, 0.35355338
    %v1604 = vadd.f32 %v1600, %v128
    %v1605 = vadd.f32 %v1601, %v129
    %v1606 = vadd.f32 %v1602, %v130
    %v1607 = vadd.f32 %v1603, %v131
    %v1608 = vsel %vm161, %v1604, -inf
    %1609 = vmax.xlane.f32.xlu0 %v1608
    %v1610 = vpop.xlane.xlu0 %1609
    %v1611 = vsel %vm161, %v1605, -inf
    %1612 = vmax.xlane.f32.xlu0 %v1611
    %v1613 = vpop.xlane.xlu0 %1612
    %v1614 = vsel %vm161, %v1606, -inf
    %1615 = vmax.xlane.f32.xlu0 %v1614
    %v1616 = vpop.xlane.xlu0 %1615
    %v1617 = vsel %vm161, %v1607, -inf
    %1618 = vmax.xlane.f32.xlu0 %v1617
    %v1619 = vpop.xlane.xlu0 %1618
    %v1620 = vsub.f32 %v1604, %v1610
    %v1621 = vsub.f32 %v1605, %v1613
    %v1622 = vsub.f32 %v1606, %v1616
    %v1623 = vsub.f32 %v1607, %v1619
    %v1624 = vmul.f32 %v1620, 1.442695
    %v1625 = vpow.pop %v1624
    %v1626 = vmul.f32 %v1621, 1.442695
    %v1627 = vpow.pop %v1626
    %v1628 = vmul.f32 %v1622, 1.442695
    %v1629 = vpow.pop %v1628
    %v1630 = vmul.f32 %v1623, 1.442695
    %v1631 = vpow.pop %v1630
    %v1632 = vsel %vm161, %v1625, 0.0
    %1633 = vadd.xlane.f32.xlu0 %v1632
    %v1634 = vpop.xlane.xlu0 %1633
    %v1635 = vsel %vm161, %v1627, 0.0
    %1636 = vadd.xlane.f32.xlu0 %v1635
    %v1637 = vpop.xlane.xlu0 %1636
    %v1638 = vsel %vm161, %v1629, 0.0
    %1639 = vadd.xlane.f32.xlu0 %v1638
    %v1640 = vpop.xlane.xlu0 %1639
    %v1641 = vsel %vm161, %v1631, 0.0
    %1642 = vadd.xlane.f32.xlu0 %v1641
    %v1643 = vpop.xlane.xlu0 %1642
    %v1644 = vrcp.pop %v1634
    %v1645 = vrcp.pop %v1637
    %v1646 = vrcp.pop %v1640
    %v1647 = vrcp.pop %v1643
    %v1648 = vmul.f32 %v1625, %v1644
    %v1649 = vmul.f32 %v1627, %v1645
    %v1650 = vmul.f32 %v1629, %v1646
    %v1651 = vmul.f32 %v1631, %v1647
    %1652 = vrot.lane.b32.xlu0 %v1532, 64
    %v1653 = vpop.permute.xlu0 %1652
    %1654 = vrot.lane.b32.xlu0 %v1535, 64
    %v1655 = vpop.permute.xlu0 %1654
    %1656 = vrot.lane.b32.xlu0 %v1538, 64
    %v1657 = vpop.permute.xlu0 %1656
    %1658 = vrot.lane.b32.xlu0 %v1541, 64
    %v1659 = vpop.permute.xlu0 %1658
    %v1665 = vsel %vm161, %v1648, 0
    %v1668 = vsel %vm161, %v1649, 0
    %v1671 = vsel %vm161, %v1650, 0
    %v1674 = vsel %vm161, %v1651, 0
    %1676 = vmatpush.msra.mxu0 0.0
    %1677 = vmatpush.msra.mxu0 0.0
    %1678 = vmatpush.msra.mxu0 0.0
    %1679 = vmatpush.msra.mxu0 0.0
    %1680 = vmatpush.msra.mxu0 0.0
    %1681 = vmatpush.msra.mxu0 0.0
    %1682 = vmatpush.msra.mxu0 0.0
    %1683 = vmatpush.msra.mxu0 0.0
    %1684 = vmatpush.msra.mxu0 0.0
    %1685 = vmatpush.msra.mxu0 0.0
    %1686 = vmatpush.msra.mxu0 0.0
    %1687 = vmatpush.msra.mxu0 0.0
    %1688 = vmatpush.msra.mxu0 %v1659
    %1689 = vmatpush.msra.mxu0 %v1657
    %1690 = vmatpush.msra.mxu0 %v1655
    %1691 = vmatpush.msra.mxu0 %v1653
    %1692 = vmatmul.f32.gmra.mxu0 %v1665
    %v1693 = vpop.f32.mrf.mxu0
    %v1694 = vadd.f32 0.0, %v1693
    %1695 = vmatmul.f32.gmra.mxu0 %v1668
    %v1696 = vpop.f32.mrf.mxu0
    %v1697 = vadd.f32 0.0, %v1696
    %1698 = vmatmul.f32.gmra.mxu0 %v1671
    %v1699 = vpop.f32.mrf.mxu0
    %v1700 = vadd.f32 0.0, %v1699
    %1701 = vmatmul.f32.gmra.mxu0 %v1674
    %v1702 = vpop.f32.mrf.mxu0
    %v1703 = vadd.f32 0.0, %v1702
    %1704 = vdwg.mxu0
    %1705 = vrot.lane.b32.xlu0 %v1532, 120
    %v1706 = vpop.permute.xlu0 %1705
    %1707 = vrot.lane.b32.xlu0 %v1535, 120
    %v1708 = vpop.permute.xlu0 %1707
    %1709 = vrot.lane.b32.xlu0 %v1538, 120
    %v1710 = vpop.permute.xlu0 %1709
    %1711 = vrot.lane.b32.xlu0 %v1541, 120
    %v1712 = vpop.permute.xlu0 %1711
    %1713 = vrot.lane.b32.xlu0 %v1532, 88
    %v1714 = vpop.permute.xlu0 %1713
    %1715 = vrot.lane.b32.xlu0 %v1535, 88
    %v1716 = vpop.permute.xlu0 %1715
    %1717 = vrot.lane.b32.xlu0 %v1538, 88
    %v1718 = vpop.permute.xlu0 %1717
    %1719 = vrot.lane.b32.xlu0 %v1541, 88
    %v1720 = vpop.permute.xlu0 %1719
    %v1721 = vsel %vm320, %v1706, 0
    %v1723 = vsel %vm320, %v1708, 0
    %v1725 = vsel %vm320, %v1710, 0
    %v1727 = vsel %vm320, %v1712, 0
    %v1729 = vsel %vm320, %v1714, 0
    %v1731 = vsel %vm320, %v1716, 0
    %v1733 = vsel %vm320, %v1718, 0
    %v1735 = vsel %vm320, %v1720, 0
    %1737 = vmatpush.xpose.msra.mxu0 0.0
    %1738 = vmatpush.xpose.msra.mxu0 0.0
    %1739 = vmatpush.xpose.msra.mxu0 0.0
    %1740 = vmatpush.xpose.msra.mxu0 0.0
    %1741 = vmatpush.xpose.msra.mxu0 0.0
    %1742 = vmatpush.xpose.msra.mxu0 0.0
    %1743 = vmatpush.xpose.msra.mxu0 0.0
    %1744 = vmatpush.xpose.msra.mxu0 0.0
    %1745 = vmatpush.xpose.msra.mxu0 0.0
    %1746 = vmatpush.xpose.msra.mxu0 0.0
    %1747 = vmatpush.xpose.msra.mxu0 0.0
    %1748 = vmatpush.xpose.msra.mxu0 0.0
    %1749 = vmatpush.xpose.msra.mxu0 %v1735
    %1750 = vmatpush.xpose.msra.mxu0 %v1733
    %1751 = vmatpush.xpose.msra.mxu0 %v1731
    %1752 = vmatpush.xpose.msra.mxu0 %v1729
    %1753 = vmatmul.f32.gmra.mxu0 %v1721
    %v1754 = vpop.f32.mrf.mxu0
    %v1755 = vadd.f32 0.0, %v1754
    %1756 = vmatmul.f32.gmra.mxu0 %v1723
    %v1757 = vpop.f32.mrf.mxu0
    %v1758 = vadd.f32 0.0, %v1757
    %1759 = vmatmul.f32.gmra.mxu0 %v1725
    %v1760 = vpop.f32.mrf.mxu0
    %v1761 = vadd.f32 0.0, %v1760
    %1762 = vmatmul.f32.gmra.mxu0 %v1727
    %v1763 = vpop.f32.mrf.mxu0
    %v1764 = vadd.f32 0.0, %v1763
    %1765 = vdwg.mxu0
    %v1766 = vmul.f32 %v1755, 0.35355338
    %v1767 = vmul.f32 %v1758, 0.35355338
    %v1768 = vmul.f32 %v1761, 0.35355338
    %v1769 = vmul.f32 %v1764, 0.35355338
    %v1770 = vadd.f32 %v1766, %v128
    %v1771 = vadd.f32 %v1767, %v129
    %v1772 = vadd.f32 %v1768, %v130
    %v1773 = vadd.f32 %v1769, %v131
    %v1774 = vsel %vm161, %v1770, -inf
    %1775 = vmax.xlane.f32.xlu0 %v1774
    %v1776 = vpop.xlane.xlu0 %1775
    %v1777 = vsel %vm161, %v1771, -inf
    %1778 = vmax.xlane.f32.xlu0 %v1777
    %v1779 = vpop.xlane.xlu0 %1778
    %v1780 = vsel %vm161, %v1772, -inf
    %1781 = vmax.xlane.f32.xlu0 %v1780
    %v1782 = vpop.xlane.xlu0 %1781
    %v1783 = vsel %vm161, %v1773, -inf
    %1784 = vmax.xlane.f32.xlu0 %v1783
    %v1785 = vpop.xlane.xlu0 %1784
    %v1786 = vsub.f32 %v1770, %v1776
    %v1787 = vsub.f32 %v1771, %v1779
    %v1788 = vsub.f32 %v1772, %v1782
    %v1789 = vsub.f32 %v1773, %v1785
    %v1790 = vmul.f32 %v1786, 1.442695
    %v1791 = vpow.pop %v1790
    %v1792 = vmul.f32 %v1787, 1.442695
    %v1793 = vpow.pop %v1792
    %v1794 = vmul.f32 %v1788, 1.442695
    %v1795 = vpow.pop %v1794
    %v1796 = vmul.f32 %v1789, 1.442695
    %v1797 = vpow.pop %v1796
    %v1798 = vsel %vm161, %v1791, 0.0
    %1799 = vadd.xlane.f32.xlu0 %v1798
    %v1800 = vpop.xlane.xlu0 %1799
    %v1801 = vsel %vm161, %v1793, 0.0
    %1802 = vadd.xlane.f32.xlu0 %v1801
    %v1803 = vpop.xlane.xlu0 %1802
    %v1804 = vsel %vm161, %v1795, 0.0
    %1805 = vadd.xlane.f32.xlu0 %v1804
    %v1806 = vpop.xlane.xlu0 %1805
    %v1807 = vsel %vm161, %v1797, 0.0
    %1808 = vadd.xlane.f32.xlu0 %v1807
    %v1809 = vpop.xlane.xlu0 %1808
    %v1810 = vrcp.pop %v1800
    %v1811 = vrcp.pop %v1803
    %v1812 = vrcp.pop %v1806
    %v1813 = vrcp.pop %v1809
    %v1814 = vmul.f32 %v1791, %v1810
    %v1815 = vmul.f32 %v1793, %v1811
    %v1816 = vmul.f32 %v1795, %v1812
    %v1817 = vmul.f32 %v1797, %v1813
    %1818 = vrot.lane.b32.xlu0 %v1532, 56
    %v1819 = vpop.permute.xlu0 %1818
    %1820 = vrot.lane.b32.xlu0 %v1535, 56
    %v1821 = vpop.permute.xlu0 %1820
    %1822 = vrot.lane.b32.xlu0 %v1538, 56
    %v1823 = vpop.permute.xlu0 %1822
    %1824 = vrot.lane.b32.xlu0 %v1541, 56
    %v1825 = vpop.permute.xlu0 %1824
    %v1831 = vsel %vm161, %v1814, 0
    %v1834 = vsel %vm161, %v1815, 0
    %v1837 = vsel %vm161, %v1816, 0
    %v1840 = vsel %vm161, %v1817, 0
    %1842 = vmatpush.msra.mxu0 0.0
    %1843 = vmatpush.msra.mxu0 0.0
    %1844 = vmatpush.msra.mxu0 0.0
    %1845 = vmatpush.msra.mxu0 0.0
    %1846 = vmatpush.msra.mxu0 0.0
    %1847 = vmatpush.msra.mxu0 0.0
    %1848 = vmatpush.msra.mxu0 0.0
    %1849 = vmatpush.msra.mxu0 0.0
    %1850 = vmatpush.msra.mxu0 0.0
    %1851 = vmatpush.msra.mxu0 0.0
    %1852 = vmatpush.msra.mxu0 0.0
    %1853 = vmatpush.msra.mxu0 0.0
    %1854 = vmatpush.msra.mxu0 %v1825
    %1855 = vmatpush.msra.mxu0 %v1823
    %1856 = vmatpush.msra.mxu0 %v1821
    %1857 = vmatpush.msra.mxu0 %v1819
    %1858 = vmatmul.f32.gmra.mxu0 %v1831
    %v1859 = vpop.f32.mrf.mxu0
    %v1860 = vadd.f32 0.0, %v1859
    %1861 = vmatmul.f32.gmra.mxu0 %v1834
    %v1862 = vpop.f32.mrf.mxu0
    %v1863 = vadd.f32 0.0, %v1862
    %1864 = vmatmul.f32.gmra.mxu0 %v1837
    %v1865 = vpop.f32.mrf.mxu0
    %v1866 = vadd.f32 0.0, %v1865
    %1867 = vmatmul.f32.gmra.mxu0 %v1840
    %v1868 = vpop.f32.mrf.mxu0
    %v1869 = vadd.f32 0.0, %v1868
    %1870 = vdwg.mxu0
    %1871 = vrot.lane.b32.xlu0 %v1532, 112
    %v1872 = vpop.permute.xlu0 %1871
    %1873 = vrot.lane.b32.xlu0 %v1535, 112
    %v1874 = vpop.permute.xlu0 %1873
    %1875 = vrot.lane.b32.xlu0 %v1538, 112
    %v1876 = vpop.permute.xlu0 %1875
    %1877 = vrot.lane.b32.xlu0 %v1541, 112
    %v1878 = vpop.permute.xlu0 %1877
    %1879 = vrot.lane.b32.xlu0 %v1532, 80
    %v1880 = vpop.permute.xlu0 %1879
    %1881 = vrot.lane.b32.xlu0 %v1535, 80
    %v1882 = vpop.permute.xlu0 %1881
    %1883 = vrot.lane.b32.xlu0 %v1538, 80
    %v1884 = vpop.permute.xlu0 %1883
    %1885 = vrot.lane.b32.xlu0 %v1541, 80
    %v1886 = vpop.permute.xlu0 %1885
    %v1887 = vsel %vm320, %v1872, 0
    %v1889 = vsel %vm320, %v1874, 0
    %v1891 = vsel %vm320, %v1876, 0
    %v1893 = vsel %vm320, %v1878, 0
    %v1895 = vsel %vm320, %v1880, 0
    %v1897 = vsel %vm320, %v1882, 0
    %v1899 = vsel %vm320, %v1884, 0
    %v1901 = vsel %vm320, %v1886, 0
    %1903 = vmatpush.xpose.msra.mxu0 0.0
    %1904 = vmatpush.xpose.msra.mxu0 0.0
    %1905 = vmatpush.xpose.msra.mxu0 0.0
    %1906 = vmatpush.xpose.msra.mxu0 0.0
    %1907 = vmatpush.xpose.msra.mxu0 0.0
    %1908 = vmatpush.xpose.msra.mxu0 0.0
    %1909 = vmatpush.xpose.msra.mxu0 0.0
    %1910 = vmatpush.xpose.msra.mxu0 0.0
    %1911 = vmatpush.xpose.msra.mxu0 0.0
    %1912 = vmatpush.xpose.msra.mxu0 0.0
    %1913 = vmatpush.xpose.msra.mxu0 0.0
    %1914 = vmatpush.xpose.msra.mxu0 0.0
    %1915 = vmatpush.xpose.msra.mxu0 %v1901
    %1916 = vmatpush.xpose.msra.mxu0 %v1899
    %1917 = vmatpush.xpose.msra.mxu0 %v1897
    %1918 = vmatpush.xpose.msra.mxu0 %v1895
    %1919 = vmatmul.f32.gmra.mxu0 %v1887
    %v1920 = vpop.f32.mrf.mxu0
    %v1921 = vadd.f32 0.0, %v1920
    %1922 = vmatmul.f32.gmra.mxu0 %v1889
    %v1923 = vpop.f32.mrf.mxu0
    %v1924 = vadd.f32 0.0, %v1923
    %1925 = vmatmul.f32.gmra.mxu0 %v1891
    %v1926 = vpop.f32.mrf.mxu0
    %v1927 = vadd.f32 0.0, %v1926
    %1928 = vmatmul.f32.gmra.mxu0 %v1893
    %v1929 = vpop.f32.mrf.mxu0
    %v1930 = vadd.f32 0.0, %v1929
    %1931 = vdwg.mxu0
    %v1932 = vmul.f32 %v1921, 0.35355338
    %v1933 = vmul.f32 %v1924, 0.35355338
    %v1934 = vmul.f32 %v1927, 0.35355338
    %v1935 = vmul.f32 %v1930, 0.35355338
    %v1936 = vadd.f32 %v1932, %v128
    %v1937 = vadd.f32 %v1933, %v129
    %v1938 = vadd.f32 %v1934, %v130
    %v1939 = vadd.f32 %v1935, %v131
    %v1940 = vsel %vm161, %v1936, -inf
    %1941 = vmax.xlane.f32.xlu0 %v1940
    %v1942 = vpop.xlane.xlu0 %1941
    %v1943 = vsel %vm161, %v1937, -inf
    %1944 = vmax.xlane.f32.xlu0 %v1943
    %v1945 = vpop.xlane.xlu0 %1944
    %v1946 = vsel %vm161, %v1938, -inf
    %1947 = vmax.xlane.f32.xlu0 %v1946
    %v1948 = vpop.xlane.xlu0 %1947
    %v1949 = vsel %vm161, %v1939, -inf
    %1950 = vmax.xlane.f32.xlu0 %v1949
    %v1951 = vpop.xlane.xlu0 %1950
    %v1952 = vsub.f32 %v1936, %v1942
    %v1953 = vsub.f32 %v1937, %v1945
    %v1954 = vsub.f32 %v1938, %v1948
    %v1955 = vsub.f32 %v1939, %v1951
    %v1956 = vmul.f32 %v1952, 1.442695
    %v1957 = vpow.pop %v1956
    %v1958 = vmul.f32 %v1953, 1.442695
    %v1959 = vpow.pop %v1958
    %v1960 = vmul.f32 %v1954, 1.442695
    %v1961 = vpow.pop %v1960
    %v1962 = vmul.f32 %v1955, 1.442695
    %v1963 = vpow.pop %v1962
    %v1964 = vsel %vm161, %v1957, 0.0
    %1965 = vadd.xlane.f32.xlu0 %v1964
    %v1966 = vpop.xlane.xlu0 %1965
    %v1967 = vsel %vm161, %v1959, 0.0
    %1968 = vadd.xlane.f32.xlu0 %v1967
    %v1969 = vpop.xlane.xlu0 %1968
    %v1970 = vsel %vm161, %v1961, 0.0
    %1971 = vadd.xlane.f32.xlu0 %v1970
    %v1972 = vpop.xlane.xlu0 %1971
    %v1973 = vsel %vm161, %v1963, 0.0
    %1974 = vadd.xlane.f32.xlu0 %v1973
    %v1975 = vpop.xlane.xlu0 %1974
    %v1976 = vrcp.pop %v1966
    %v1977 = vrcp.pop %v1969
    %v1978 = vrcp.pop %v1972
    %v1979 = vrcp.pop %v1975
    %v1980 = vmul.f32 %v1957, %v1976
    %v1981 = vmul.f32 %v1959, %v1977
    %v1982 = vmul.f32 %v1961, %v1978
    %v1983 = vmul.f32 %v1963, %v1979
    %1984 = vrot.lane.b32.xlu0 %v1532, 48
    %v1985 = vpop.permute.xlu0 %1984
    %1986 = vrot.lane.b32.xlu0 %v1535, 48
    %v1987 = vpop.permute.xlu0 %1986
    %1988 = vrot.lane.b32.xlu0 %v1538, 48
    %v1989 = vpop.permute.xlu0 %1988
    %1990 = vrot.lane.b32.xlu0 %v1541, 48
    %v1991 = vpop.permute.xlu0 %1990
    %v1997 = vsel %vm161, %v1980, 0
    %v2000 = vsel %vm161, %v1981, 0
    %v2003 = vsel %vm161, %v1982, 0
    %v2006 = vsel %vm161, %v1983, 0
    %2008 = vmatpush.msra.mxu0 0.0
    %2009 = vmatpush.msra.mxu0 0.0
    %2010 = vmatpush.msra.mxu0 0.0
    %2011 = vmatpush.msra.mxu0 0.0
    %2012 = vmatpush.msra.mxu0 0.0
    %2013 = vmatpush.msra.mxu0 0.0
    %2014 = vmatpush.msra.mxu0 0.0
    %2015 = vmatpush.msra.mxu0 0.0
    %2016 = vmatpush.msra.mxu0 0.0
    %2017 = vmatpush.msra.mxu0 0.0
    %2018 = vmatpush.msra.mxu0 0.0
    %2019 = vmatpush.msra.mxu0 0.0
    %2020 = vmatpush.msra.mxu0 %v1991
    %2021 = vmatpush.msra.mxu0 %v1989
    %2022 = vmatpush.msra.mxu0 %v1987
    %2023 = vmatpush.msra.mxu0 %v1985
    %2024 = vmatmul.f32.gmra.mxu0 %v1997
    %v2025 = vpop.f32.mrf.mxu0
    %v2026 = vadd.f32 0.0, %v2025
    %2027 = vmatmul.f32.gmra.mxu0 %v2000
    %v2028 = vpop.f32.mrf.mxu0
    %v2029 = vadd.f32 0.0, %v2028
    %2030 = vmatmul.f32.gmra.mxu0 %v2003
    %v2031 = vpop.f32.mrf.mxu0
    %v2032 = vadd.f32 0.0, %v2031
    %2033 = vmatmul.f32.gmra.mxu0 %v2006
    %v2034 = vpop.f32.mrf.mxu0
    %v2035 = vadd.f32 0.0, %v2034
    %2036 = vdwg.mxu0
    %2037 = vrot.lane.b32.xlu0 %v1532, 104
    %v2038 = vpop.permute.xlu0 %2037
    %2039 = vrot.lane.b32.xlu0 %v1535, 104
    %v2040 = vpop.permute.xlu0 %2039
    %2041 = vrot.lane.b32.xlu0 %v1538, 104
    %v2042 = vpop.permute.xlu0 %2041
    %2043 = vrot.lane.b32.xlu0 %v1541, 104
    %v2044 = vpop.permute.xlu0 %2043
    %2045 = vrot.lane.b32.xlu0 %v1532, 72
    %v2046 = vpop.permute.xlu0 %2045
    %2047 = vrot.lane.b32.xlu0 %v1535, 72
    %v2048 = vpop.permute.xlu0 %2047
    %2049 = vrot.lane.b32.xlu0 %v1538, 72
    %v2050 = vpop.permute.xlu0 %2049
    %2051 = vrot.lane.b32.xlu0 %v1541, 72
    %v2052 = vpop.permute.xlu0 %2051
    %v2053 = vsel %vm320, %v2038, 0
    %v2055 = vsel %vm320, %v2040, 0
    %v2057 = vsel %vm320, %v2042, 0
    %v2059 = vsel %vm320, %v2044, 0
    %v2061 = vsel %vm320, %v2046, 0
    %v2063 = vsel %vm320, %v2048, 0
    %v2065 = vsel %vm320, %v2050, 0
    %v2067 = vsel %vm320, %v2052, 0
    %2069 = vmatpush.xpose.msra.mxu0 0.0
    %2070 = vmatpush.xpose.msra.mxu0 0.0
    %2071 = vmatpush.xpose.msra.mxu0 0.0
    %2072 = vmatpush.xpose.msra.mxu0 0.0
    %2073 = vmatpush.xpose.msra.mxu0 0.0
    %2074 = vmatpush.xpose.msra.mxu0 0.0
    %2075 = vmatpush.xpose.msra.mxu0 0.0
    %2076 = vmatpush.xpose.msra.mxu0 0.0
    %2077 = vmatpush.xpose.msra.mxu0 0.0
    %2078 = vmatpush.xpose.msra.mxu0 0.0
    %2079 = vmatpush.xpose.msra.mxu0 0.0
    %2080 = vmatpush.xpose.msra.mxu0 0.0
    %2081 = vmatpush.xpose.msra.mxu0 %v2067
    %2082 = vmatpush.xpose.msra.mxu0 %v2065
    %2083 = vmatpush.xpose.msra.mxu0 %v2063
    %2084 = vmatpush.xpose.msra.mxu0 %v2061
    %2085 = vmatmul.f32.gmra.mxu0 %v2053
    %v2086 = vpop.f32.mrf.mxu0
    %v2087 = vadd.f32 0.0, %v2086
    %2088 = vmatmul.f32.gmra.mxu0 %v2055
    %v2089 = vpop.f32.mrf.mxu0
    %v2090 = vadd.f32 0.0, %v2089
    %2091 = vmatmul.f32.gmra.mxu0 %v2057
    %v2092 = vpop.f32.mrf.mxu0
    %v2093 = vadd.f32 0.0, %v2092
    %2094 = vmatmul.f32.gmra.mxu0 %v2059
    %v2095 = vpop.f32.mrf.mxu0
    %v2096 = vadd.f32 0.0, %v2095
    %2097 = vdwg.mxu0
    %v2098 = vmul.f32 %v2087, 0.35355338
    %v2099 = vmul.f32 %v2090, 0.35355338
    %v2100 = vmul.f32 %v2093, 0.35355338
    %v2101 = vmul.f32 %v2096, 0.35355338
    %v2102 = vadd.f32 %v2098, %v128
    %v2103 = vadd.f32 %v2099, %v129
    %v2104 = vadd.f32 %v2100, %v130
    %v2105 = vadd.f32 %v2101, %v131
    %v2106 = vsel %vm161, %v2102, -inf
    %2107 = vmax.xlane.f32.xlu0 %v2106
    %v2108 = vpop.xlane.xlu0 %2107
    %v2109 = vsel %vm161, %v2103, -inf
    %2110 = vmax.xlane.f32.xlu0 %v2109
    %v2111 = vpop.xlane.xlu0 %2110
    %v2112 = vsel %vm161, %v2104, -inf
    %2113 = vmax.xlane.f32.xlu0 %v2112
    %v2114 = vpop.xlane.xlu0 %2113
    %v2115 = vsel %vm161, %v2105, -inf
    %2116 = vmax.xlane.f32.xlu0 %v2115
    %v2117 = vpop.xlane.xlu0 %2116
    %v2118 = vsub.f32 %v2102, %v2108
    %v2119 = vsub.f32 %v2103, %v2111
    %v2120 = vsub.f32 %v2104, %v2114
    %v2121 = vsub.f32 %v2105, %v2117
    %v2122 = vmul.f32 %v2118, 1.442695
    %v2123 = vpow.pop %v2122
    %v2124 = vmul.f32 %v2119, 1.442695
    %v2125 = vpow.pop %v2124
    %v2126 = vmul.f32 %v2120, 1.442695
    %v2127 = vpow.pop %v2126
    %v2128 = vmul.f32 %v2121, 1.442695
    %v2129 = vpow.pop %v2128
    %v2130 = vsel %vm161, %v2123, 0.0
    %2131 = vadd.xlane.f32.xlu0 %v2130
    %v2132 = vpop.xlane.xlu0 %2131
    %v2133 = vsel %vm161, %v2125, 0.0
    %2134 = vadd.xlane.f32.xlu0 %v2133
    %v2135 = vpop.xlane.xlu0 %2134
    %v2136 = vsel %vm161, %v2127, 0.0
    %2137 = vadd.xlane.f32.xlu0 %v2136
    %v2138 = vpop.xlane.xlu0 %2137
    %v2139 = vsel %vm161, %v2129, 0.0
    %2140 = vadd.xlane.f32.xlu0 %v2139
    %v2141 = vpop.xlane.xlu0 %2140
    %v2142 = vrcp.pop %v2132
    %v2143 = vrcp.pop %v2135
    %v2144 = vrcp.pop %v2138
    %v2145 = vrcp.pop %v2141
    %v2146 = vmul.f32 %v2123, %v2142
    %v2147 = vmul.f32 %v2125, %v2143
    %v2148 = vmul.f32 %v2127, %v2144
    %v2149 = vmul.f32 %v2129, %v2145
    %2150 = vrot.lane.b32.xlu0 %v1532, 40
    %v2151 = vpop.permute.xlu0 %2150
    %2152 = vrot.lane.b32.xlu0 %v1535, 40
    %v2153 = vpop.permute.xlu0 %2152
    %2154 = vrot.lane.b32.xlu0 %v1538, 40
    %v2155 = vpop.permute.xlu0 %2154
    %2156 = vrot.lane.b32.xlu0 %v1541, 40
    %v2157 = vpop.permute.xlu0 %2156
    %v2163 = vsel %vm161, %v2146, 0
    %v2166 = vsel %vm161, %v2147, 0
    %v2169 = vsel %vm161, %v2148, 0
    %v2172 = vsel %vm161, %v2149, 0
    %2174 = vmatpush.msra.mxu0 0.0
    %2175 = vmatpush.msra.mxu0 0.0
    %2176 = vmatpush.msra.mxu0 0.0
    %2177 = vmatpush.msra.mxu0 0.0
    %2178 = vmatpush.msra.mxu0 0.0
    %2179 = vmatpush.msra.mxu0 0.0
    %2180 = vmatpush.msra.mxu0 0.0
    %2181 = vmatpush.msra.mxu0 0.0
    %2182 = vmatpush.msra.mxu0 0.0
    %2183 = vmatpush.msra.mxu0 0.0
    %2184 = vmatpush.msra.mxu0 0.0
    %2185 = vmatpush.msra.mxu0 0.0
    %2186 = vmatpush.msra.mxu0 %v2157
    %2187 = vmatpush.msra.mxu0 %v2155
    %2188 = vmatpush.msra.mxu0 %v2153
    %2189 = vmatpush.msra.mxu0 %v2151
    %2190 = vmatmul.f32.gmra.mxu0 %v2163
    %v2191 = vpop.f32.mrf.mxu0
    %v2192 = vadd.f32 0.0, %v2191
    %2193 = vmatmul.f32.gmra.mxu0 %v2166
    %v2194 = vpop.f32.mrf.mxu0
    %v2195 = vadd.f32 0.0, %v2194
    %2196 = vmatmul.f32.gmra.mxu0 %v2169
    %v2197 = vpop.f32.mrf.mxu0
    %v2198 = vadd.f32 0.0, %v2197
    %2199 = vmatmul.f32.gmra.mxu0 %v2172
    %v2200 = vpop.f32.mrf.mxu0
    %v2201 = vadd.f32 0.0, %v2200
    %2202 = vdwg.mxu0
    %2207 = vrot.lane.b32.xlu0 %v1860, 8
    %v2208 = vpop.permute.xlu0 %2207
    %2209 = vrot.lane.b32.xlu0 %v1863, 8
    %v2210 = vpop.permute.xlu0 %2209
    %2211 = vrot.lane.b32.xlu0 %v1866, 8
    %v2212 = vpop.permute.xlu0 %2211
    %2213 = vrot.lane.b32.xlu0 %v1869, 8
    %v2214 = vpop.permute.xlu0 %2213
    %2223 = vrot.lane.b32.xlu0 %v2026, 16
    %v2224 = vpop.permute.xlu0 %2223
    %2225 = vrot.lane.b32.xlu0 %v2029, 16
    %v2226 = vpop.permute.xlu0 %2225
    %2227 = vrot.lane.b32.xlu0 %v2032, 16
    %v2228 = vpop.permute.xlu0 %2227
    %2229 = vrot.lane.b32.xlu0 %v2035, 16
    %v2230 = vpop.permute.xlu0 %2229
    %2239 = vrot.lane.b32.xlu0 %v2192, 24
    %v2240 = vpop.permute.xlu0 %2239
    %2241 = vrot.lane.b32.xlu0 %v2195, 24
    %v2242 = vpop.permute.xlu0 %2241
    %2243 = vrot.lane.b32.xlu0 %v2198, 24
    %v2244 = vpop.permute.xlu0 %2243
    %2245 = vrot.lane.b32.xlu0 %v2201, 24
    %v2246 = vpop.permute.xlu0 %2245
    %v2251 = vsel %vm320, %v1694, %v2208
    %v2252 = vsel %vm320, %v1697, %v2210
    %v2253 = vsel %vm320, %v1700, %v2212
    %v2254 = vsel %vm320, %v1703, %v2214
    %v2255 = vsel %vm1021, %v2251, %v2224
    %v2256 = vsel %vm1021, %v2252, %v2226
    %v2257 = vsel %vm1021, %v2253, %v2228
    %v2258 = vsel %vm1021, %v2254, %v2230
    %v2259 = vsel %vm1026, %v2255, %v2240
    %v2260 = vsel %vm1026, %v2256, %v2242
    %v2261 = vsel %vm1026, %v2257, %v2244
    %v2262 = vsel %vm1026, %v2258, %v2246
    %v2264 = vsel %vm161, %v2259, 0
    %v2267 = vsel %vm161, %v2260, 0
    %v2270 = vsel %vm161, %v2261, 0
    %v2273 = vsel %vm161, %v2262, 0
    %2275 = vmatpush.msra.mxu0 0.0
    %2276 = vmatpush.msra.mxu0 0.0
    %2277 = vmatpush.msra.mxu0 0.0
    %2278 = vmatpush.msra.mxu0 0.0
    %2279 = vmatpush.msra.mxu0 0.0
    %2280 = vmatpush.msra.mxu0 0.0
    %2281 = vmatpush.msra.mxu0 0.0
    %2282 = vmatpush.msra.mxu0 0.0
    %2283 = vmatpush.msra.mxu0 0.0
    %2284 = vmatpush.msra.mxu0 0.0
    %2285 = vmatpush.msra.mxu0 0.0
    %2286 = vmatpush.msra.mxu0 0.0
    %2287 = vmatpush.msra.mxu0 %v1381
    %2288 = vmatpush.msra.mxu0 %v1380
    %2289 = vmatpush.msra.mxu0 %v1379
    %2290 = vmatpush.msra.mxu0 %v1378
    %2291 = vmatmul.f32.gmra.mxu0 %v2264
    %v2292 = vpop.f32.mrf.mxu0
    %v2293 = vadd.f32 0.0, %v2292
    %2294 = vmatmul.f32.gmra.mxu0 %v2267
    %v2295 = vpop.f32.mrf.mxu0
    %v2296 = vadd.f32 0.0, %v2295
    %2297 = vmatmul.f32.gmra.mxu0 %v2270
    %v2298 = vpop.f32.mrf.mxu0
    %v2299 = vadd.f32 0.0, %v2298
    %2300 = vmatmul.f32.gmra.mxu0 %v2273
    %v2301 = vpop.f32.mrf.mxu0
    %v2302 = vadd.f32 0.0, %v2301
    %2303 = vdwg.mxu0
    %v2304 = vadd.f32 %v1369, %v2293
    %v2305 = vadd.f32 %v1370, %v2296
    %v2306 = vadd.f32 %v1371, %v2299
    %v2307 = vadd.f32 %v1372, %v2302
    %v2308 = vperm.slane %v1382, 4
    %v2309 = vadd.f32 %v2304, %v2308
    %v2310 = vadd.f32 %v2305, %v2308
    %v2311 = vadd.f32 %v2306, %v2308
    %v2312 = vadd.f32 %v2307, %v2308
    %v2313 = vsel %vm161, %v2309, 0.0
    %2314 = vadd.xlane.f32.xlu0 %v2313
    %v2315 = vpop.xlane.xlu0 %2314
    %v2316 = vsel %vm161, %v2310, 0.0
    %2317 = vadd.xlane.f32.xlu0 %v2316
    %v2318 = vpop.xlane.xlu0 %2317
    %v2319 = vsel %vm161, %v2311, 0.0
    %2320 = vadd.xlane.f32.xlu0 %v2319
    %v2321 = vpop.xlane.xlu0 %2320
    %v2322 = vsel %vm161, %v2312, 0.0
    %2323 = vadd.xlane.f32.xlu0 %v2322
    %v2324 = vpop.xlane.xlu0 %2323
    %v2325 = vmul.f32 %v2315, %v180
    %v2326 = vmul.f32 %v2318, %v180
    %v2327 = vmul.f32 %v2321, %v180
    %v2328 = vmul.f32 %v2324, %v180
    %v2329 = vsub.f32 %v2309, %v2325
    %v2330 = vsub.f32 %v2310, %v2326
    %v2331 = vsub.f32 %v2311, %v2327
    %v2332 = vsub.f32 %v2312, %v2328
    %v2333 = vmul.f32 %v2329, %v2329
    %v2334 = vmul.f32 %v2330, %v2330
    %v2335 = vmul.f32 %v2331, %v2331
    %v2336 = vmul.f32 %v2332, %v2332
    %v2337 = vsel %vm161, %v2333, 0.0
    %2338 = vadd.xlane.f32.xlu0 %v2337
    %v2339 = vpop.xlane.xlu0 %2338
    %v2340 = vsel %vm161, %v2334, 0.0
    %2341 = vadd.xlane.f32.xlu0 %v2340
    %v2342 = vpop.xlane.xlu0 %2341
    %v2343 = vsel %vm161, %v2335, 0.0
    %2344 = vadd.xlane.f32.xlu0 %v2343
    %v2345 = vpop.xlane.xlu0 %2344
    %v2346 = vsel %vm161, %v2336, 0.0
    %2347 = vadd.xlane.f32.xlu0 %v2346
    %v2348 = vpop.xlane.xlu0 %2347
    %v2349 = vmul.f32 %v2339, %v180
    %v2350 = vmul.f32 %v2342, %v180
    %v2351 = vmul.f32 %v2345, %v180
    %v2352 = vmul.f32 %v2348, %v180
    %v2353 = vadd.f32 %v2349, 1e-05
    %v2354 = vadd.f32 %v2350, 1e-05
    %v2355 = vadd.f32 %v2351, 1e-05
    %v2356 = vadd.f32 %v2352, 1e-05
    %v2357 = vrsqrt.pop %v2353
    %v2358 = vmul.f32 %v2357, %v2353
    %v2359 = vmul.f32 %v2358, %v2357
    %v2360 = vmul.f32 0.5, %v2359
    %v2361 = vsub.f32 1.5, %v2360
    %v2362 = vmul.f32 %v2357, %v2361
    %vm2363 = vweird.f32 %v2353
    %vm2364 = vweird.f32 %v2357
    %vm2365 = vmor %vm2363, %vm2364
    %v2366 = vsel %vm2365, %v2357, %v2362
    %v2367 = vrsqrt.pop %v2354
    %v2368 = vmul.f32 %v2367, %v2354
    %v2369 = vmul.f32 %v2368, %v2367
    %v2370 = vmul.f32 0.5, %v2369
    %v2371 = vsub.f32 1.5, %v2370
    %v2372 = vmul.f32 %v2367, %v2371
    %vm2373 = vweird.f32 %v2354
    %vm2374 = vweird.f32 %v2367
    %vm2375 = vmor %vm2373, %vm2374
    %v2376 = vsel %vm2375, %v2367, %v2372
    %v2377 = vrsqrt.pop %v2355
    %v2378 = vmul.f32 %v2377, %v2355
    %v2379 = vmul.f32 %v2378, %v2377
    %v2380 = vmul.f32 0.5, %v2379
    %v2381 = vsub.f32 1.5, %v2380
    %v2382 = vmul.f32 %v2377, %v2381
    %vm2383 = vweird.f32 %v2355
    %vm2384 = vweird.f32 %v2377
    %vm2385 = vmor %vm2383, %vm2384
    %v2386 = vsel %vm2385, %v2377, %v2382
    %v2387 = vrsqrt.pop %v2356
    %v2388 = vmul.f32 %v2387, %v2356
    %v2389 = vmul.f32 %v2388, %v2387
    %v2390 = vmul.f32 0.5, %v2389
    %v2391 = vsub.f32 1.5, %v2390
    %v2392 = vmul.f32 %v2387, %v2391
    %vm2393 = vweird.f32 %v2356
    %vm2394 = vweird.f32 %v2387
    %vm2395 = vmor %vm2393, %vm2394
    %v2396 = vsel %vm2395, %v2387, %v2392
    %v2397 = vmul.f32 %v2329, %v2366
    %v2398 = vmul.f32 %v2330, %v2376
    %v2399 = vmul.f32 %v2331, %v2386
    %v2400 = vmul.f32 %v2332, %v2396
    %v2401 = vperm.slane %v1382, 2
    %v2402 = vmul.f32 %v2397, %v2401
    %v2403 = vmul.f32 %v2398, %v2401
    %v2404 = vmul.f32 %v2399, %v2401
    %v2405 = vmul.f32 %v2400, %v2401
    %v2406 = vperm.slane %v1382, 3
    %v2407 = vadd.f32 %v2402, %v2406
    %v2408 = vadd.f32 %v2403, %v2406
    %v2409 = vadd.f32 %v2404, %v2406
    %v2410 = vadd.f32 %v2405, %v2406
    %v2411 = vpack.c.bf16 %v2408, %v2407
    %v2412 = vpack.c.bf16 %v2410, %v2409
    %v2413 = vperm.slane %v1382, 6
    %v2418 = vunpack.c.l.b16 %v1384
    %v2419 = vunpack.c.l.b16 %v1385
    %v2420 = vunpack.c.l.b16 %v1386
    %v2421 = vunpack.c.l.b16 %v1387
    %v2422 = vpack.c.b16 %v2419, %v2418
    %v2423 = vpack.c.b16 %v2421, %v2420
    %v2427 = vsel %vm161, %v2411, 0
    %v2430 = vsel %vm161, %v2412, 0
    %2432 = vmatpush.bf16.msra.mxu0 0
    %2433 = vmatpush.bf16.msra.mxu0 0
    %2434 = vmatpush.bf16.msra.mxu0 0
    %2435 = vmatpush.bf16.msra.mxu0 0
    %2436 = vmatpush.bf16.msra.mxu0 0
    %2437 = vmatpush.bf16.msra.mxu0 0
    %2438 = vmatpush.bf16.msra.mxu0 %v2423
    %2439 = vmatpush.bf16.msra.mxu0 %v2422
    %2440 = vmatmul.bf16.gmra.mxu0 %v2427
    %v2441 = vpop.f32.mrf.mxu0
    %v2442 = vadd.f32 %v2413, %v2441
    %v2443 = vpop.f32.mrf.mxu0
    %v2444 = vadd.f32 %v2413, %v2443
    %2445 = vmatmul.bf16.gmra.mxu0 %v2430
    %v2446 = vpop.f32.mrf.mxu0
    %v2447 = vadd.f32 %v2413, %v2446
    %v2448 = vpop.f32.mrf.mxu0
    %v2449 = vadd.f32 %v2413, %v2448
    %2450 = vdwg.mxu0
    %v2451 = vxor.u32 %v2442, 2147483648
    %v2452 = vxor.u32 %v2444, 2147483648
    %v2453 = vxor.u32 %v2447, 2147483648
    %v2454 = vxor.u32 %v2449, 2147483648
    %v2455 = vmul.f32 %v2451, 1.442695
    %v2456 = vpow.pop %v2455
    %v2457 = vmul.f32 %v2452, 1.442695
    %v2458 = vpow.pop %v2457
    %v2459 = vmul.f32 %v2453, 1.442695
    %v2460 = vpow.pop %v2459
    %v2461 = vmul.f32 %v2454, 1.442695
    %v2462 = vpow.pop %v2461
    %v2463 = vadd.f32 %v2456, 1.0
    %v2464 = vadd.f32 %v2458, 1.0
    %v2465 = vadd.f32 %v2460, 1.0
    %v2466 = vadd.f32 %v2462, 1.0
    %v2467 = vrcp.pop %v2463
    %v2468 = vmul.f32 %v2463, %v2467
    %v2469 = vsub.f32 1.0, %v2468
    %v2470 = vmul.f32 %v2467, %v2469
    %v2471 = vadd.f32 %v2467, %v2470
    %vm2472 = vweird.f32 %v2463
    %vm2473 = vweird.f32 %v2467
    %vm2474 = vmor %vm2472, %vm2473
    %v2475 = vsel %vm2474, %v2467, %v2471
    %v2476 = vand.u32 2147483647, %v2463
    %vm2477 = vcmp.eq.f32.partialorder %v2476, 8.507059e+37
    %v2478 = vand.u32 %v2463, 2147483648
    %v2479 = vor.u32 1.1754944e-38, %v2478
    %v2480 = vsel %vm2477, %v2479, %v2475
    %v2481 = vmul.f32 1.0, %v2480
    %v2482 = vrcp.pop %v2464
    %v2483 = vmul.f32 %v2464, %v2482
    %v2484 = vsub.f32 1.0, %v2483
    %v2485 = vmul.f32 %v2482, %v2484
    %v2486 = vadd.f32 %v2482, %v2485
    %vm2487 = vweird.f32 %v2464
    %vm2488 = vweird.f32 %v2482
    %vm2489 = vmor %vm2487, %vm2488
    %v2490 = vsel %vm2489, %v2482, %v2486
    %v2491 = vand.u32 2147483647, %v2464
    %vm2492 = vcmp.eq.f32.partialorder %v2491, 8.507059e+37
    %v2493 = vand.u32 %v2464, 2147483648
    %v2494 = vor.u32 1.1754944e-38, %v2493
    %v2495 = vsel %vm2492, %v2494, %v2490
    %v2496 = vmul.f32 1.0, %v2495
    %v2497 = vrcp.pop %v2465
    %v2498 = vmul.f32 %v2465, %v2497
    %v2499 = vsub.f32 1.0, %v2498
    %v2500 = vmul.f32 %v2497, %v2499
    %v2501 = vadd.f32 %v2497, %v2500
    %vm2502 = vweird.f32 %v2465
    %vm2503 = vweird.f32 %v2497
    %vm2504 = vmor %vm2502, %vm2503
    %v2505 = vsel %vm2504, %v2497, %v2501
    %v2506 = vand.u32 2147483647, %v2465
    %vm2507 = vcmp.eq.f32.partialorder %v2506, 8.507059e+37
    %v2508 = vand.u32 %v2465, 2147483648
    %v2509 = vor.u32 1.1754944e-38, %v2508
    %v2510 = vsel %vm2507, %v2509, %v2505
    %v2511 = vmul.f32 1.0, %v2510
    %v2512 = vrcp.pop %v2466
    %v2513 = vmul.f32 %v2466, %v2512
    %v2514 = vsub.f32 1.0, %v2513
    %v2515 = vmul.f32 %v2512, %v2514
    %v2516 = vadd.f32 %v2512, %v2515
    %vm2517 = vweird.f32 %v2466
    %vm2518 = vweird.f32 %v2512
    %vm2519 = vmor %vm2517, %vm2518
    %v2520 = vsel %vm2519, %v2512, %v2516
    %v2521 = vand.u32 2147483647, %v2466
    %vm2522 = vcmp.eq.f32.partialorder %v2521, 8.507059e+37
    %v2523 = vand.u32 %v2466, 2147483648
    %v2524 = vor.u32 1.1754944e-38, %v2523
    %v2525 = vsel %vm2522, %v2524, %v2520
    %v2526 = vmul.f32 1.0, %v2525
    %v2527 = vmul.f32 %v2442, %v2481
    %v2528 = vmul.f32 %v2444, %v2496
    %v2529 = vmul.f32 %v2447, %v2511
    %v2530 = vmul.f32 %v2449, %v2526
    %v2531 = vpack.c.bf16 %v2528, %v2527
    %v2532 = vpack.c.bf16 %v2530, %v2529
    %v2533 = vperm.slane %v1382, 5
    %v2550 = vunpack.c.l.b16 %v1388
    %v2551 = vunpack.c.l.b16 %v1389
    %v2552 = vunpack.c.l.b16 %v1390
    %v2553 = vunpack.c.l.b16 %v1391
    %v2554 = vunpack.c.l.b16 %v1392
    %v2555 = vunpack.c.l.b16 %v1393
    %v2556 = vunpack.c.l.b16 %v1394
    %v2557 = vunpack.c.l.b16 %v1395
    %v2558 = vunpack.c.l.b16 %v1396
    %v2559 = vunpack.c.l.b16 %v1397
    %v2560 = vunpack.c.l.b16 %v1398
    %v2561 = vunpack.c.l.b16 %v1399
    %v2562 = vunpack.c.l.b16 %v1400
    %v2563 = vunpack.c.l.b16 %v1401
    %v2564 = vunpack.c.l.b16 %v1402
    %v2565 = vunpack.c.l.b16 %v1403
    %v2566 = vpack.c.b16 %v2551, %v2550
    %v2567 = vpack.c.b16 %v2553, %v2552
    %v2568 = vpack.c.b16 %v2555, %v2554
    %v2569 = vpack.c.b16 %v2557, %v2556
    %v2570 = vpack.c.b16 %v2559, %v2558
    %v2571 = vpack.c.b16 %v2561, %v2560
    %v2572 = vpack.c.b16 %v2563, %v2562
    %v2573 = vpack.c.b16 %v2565, %v2564
    %2582 = vmatpush.bf16.msra.mxu0 %v2573
    %2583 = vmatpush.bf16.msra.mxu0 %v2572
    %2584 = vmatpush.bf16.msra.mxu0 %v2571
    %2585 = vmatpush.bf16.msra.mxu0 %v2570
    %2586 = vmatpush.bf16.msra.mxu0 %v2569
    %2587 = vmatpush.bf16.msra.mxu0 %v2568
    %2588 = vmatpush.bf16.msra.mxu0 %v2567
    %2589 = vmatpush.bf16.msra.mxu0 %v2566
    %2590 = vmatmul.bf16.gmra.mxu0 %v2531
    %v2591 = vpop.f32.mrf.mxu0
    %v2592 = vadd.f32 %v2533, %v2591
    %v2593 = vpop.f32.mrf.mxu0
    %v2594 = vadd.f32 %v2533, %v2593
    %2595 = vmatmul.bf16.gmra.mxu0 %v2532
    %v2596 = vpop.f32.mrf.mxu0
    %v2597 = vadd.f32 %v2533, %v2596
    %v2598 = vpop.f32.mrf.mxu0
    %v2599 = vadd.f32 %v2533, %v2598
    %2600 = vdwg.mxu0
    %v2601 = vadd.f32 %v2309, %v2592
    %v2602 = vadd.f32 %v2310, %v2594
    %v2603 = vadd.f32 %v2311, %v2597
    %v2604 = vadd.f32 %v2312, %v2599
    %2605 = vst.msk [vmem:[#allocation8] sm:$0xff] %vm161, %v2601
    %2606 = vst.msk [vmem:[#allocation8 + $0x8] sm:$0xff] %vm161, %v2602
    %2607 = vst.msk [vmem:[#allocation8 + $0x10] sm:$0xff] %vm161, %v2603
    %2608 = vst.msk [vmem:[#allocation8 + $0x18] sm:$0xff] %vm161, %v2604
    // Predicated region
    $region38: #{tpu_custom_call.1} parent=1 // pred_check
      _
    $region39: #{tpu_custom_call.1} parent=1 // pred_check_branch
      %2610 = sbr.rel (0) target = $region41
    $region40: #{tpu_custom_call.1} parent=1 // pred_region
      %2612 = vsyncadd [#allocation4], 0
      %s2613 = sshll.u32 [#allocation8], 4
      %s2614 = int_to_ptr.vmem [resolvable:$true] %s2613
      %s2615 = sshll.u32 %s6, 4
      %s2616 = int_to_ptr.hbm [resolvable:$true] %s2615
      %2621 = dma.vmem_to_hbm [thread:$0]  %s2614, 512, %s2616, [#allocation4], 128, 128, 8
    $region41: #{tpu_custom_call.1} parent=1 // pred_fallthru
      _
    // Predicated region
    $region42: #{tpu_custom_call.1} parent=1 // pred_check
      _
    $region43: #{tpu_custom_call.1} parent=1 // pred_check_branch
      %2623 = sbr.rel (0) target = $region45
    $region44: #{tpu_custom_call.1} parent=1 // pred_region
      %2625 = dma.done [#allocation4], 512
    $region45: #{tpu_custom_call.1} parent=1 // pred_fallthru
      _
    %2626 = vsyncpa [#allocation3], 1
    %2627 = vsyncpa [#allocation6], 1
    %2628 = vsyncpa [#allocation4], 1

</llo_original>
